<compile_context>
chip_gen: v6e
topology: v6e:2x2x1
jax: 0.10.0
libtpu: 0.0.40
codegen_flags: <defaults>
</compile_context>

<pallas_src>
import math
import jax
import jax.numpy as jnp
from jax.experimental import pallas as pl
from jax.experimental.pallas import tpu as pltpu

INPUT_DIMS = 8
LAYER_DIMS = [INPUT_DIMS, 64, 128, 128, 128, 64, 1]   # 6 Linear layers
OUT_PAD = 128                                          # lane-dense padding of the (.,1) output


def _gelu_exact(x):
    # torch.nn.GELU() default = exact erf-based GELU (computed in f32)
    return 0.5 * x * (1.0 + jax.lax.erf(x * (1.0 / math.sqrt(2.0))))


def _mlp_kernel(x_ref,
                w1, b1, w2, b2, w3, b3, w4, b4, w5, b5, w6, b6,
                out_ref):
    # bf16 operands on the MXU, f32 accumulation, f32 bias + GELU on the VPU/EUP.
    def dense(h, w_ref, b_ref):
        acc = jnp.dot(h.astype(jnp.bfloat16), w_ref[...],
                      preferred_element_type=jnp.float32)
        return acc + b_ref[...]

    h = x_ref[...].astype(jnp.float32)

    h = _gelu_exact(dense(h, w1, b1))
    # TODO(synk): nn.Dropout(0.2) is identity in eval/inference; training-mode
    # random masking is not implemented here.
    h = _gelu_exact(dense(h, w2, b2))
    h = _gelu_exact(dense(h, w3, b3))
    h = _gelu_exact(dense(h, w4, b4))
    h = _gelu_exact(dense(h, w5, b5))

    # Final layer zero-padded to 128 lanes: only column 0 is meaningful, the
    # padded columns compute to exactly 0 (zero weights / zero bias).  This
    # makes the HBM writeback a full, unmasked lane-dense store.
    out_ref[...] = dense(h, w6, b6).astype(out_ref.dtype)


def init_params(key):
    """Deterministic init mimicking torch.nn.Linear default (uniform +-1/sqrt(fan_in))."""
    params = []
    for i in range(6):
        fan_in, fan_out = LAYER_DIMS[i], LAYER_DIMS[i + 1]
        key, kw, kb = jax.random.split(key, 3)
        bound = 1.0 / math.sqrt(fan_in)
        w = jax.random.uniform(kw, (fan_in, fan_out), jnp.float32, -bound, bound)
        b = jax.random.uniform(kb, (1, fan_out), jnp.float32, -bound, bound)
        params.append((w, b))
    return params


def _pack_params(params):
    """Kernel-side parameter layout: bf16 weights, f32 biases, last layer padded to OUT_PAD."""
    packed = []
    n_layers = len(params)
    for i, (w, b) in enumerate(params):
        if i == n_layers - 1:
            w = jnp.pad(w, ((0, 0), (0, OUT_PAD - w.shape[1])))
            b = jnp.pad(b, ((0, 0), (0, OUT_PAD - b.shape[1])))
        packed.append(w.astype(jnp.bfloat16))
        packed.append(b.astype(jnp.float32))
    return packed


def surgeon_trainer_forward(x1, x2, params, tile_n=256):
    """Equivalent of SurgeonTrainer.forward(x1, x2): one fused pallas_call over both inputs."""
    n1, n2 = x1.shape[0], x2.shape[0]
    assert x1.shape[1] == INPUT_DIMS and x2.shape[1] == INPUT_DIMS

    # Fuse the two forwards: one launch, weights loaded into VMEM once.
    x = jnp.concatenate([x1, x2], axis=0).astype(jnp.float32)
    rows = x.shape[0]
    rows_pad = pl.cdiv(rows, tile_n) * tile_n
    if rows_pad != rows:
        x = jnp.pad(x, ((0, rows_pad - rows), (0, 0)))

    flat_params = _pack_params(params)

    in_specs = [pl.BlockSpec((tile_n, INPUT_DIMS), lambda i: (i, 0))]
    for p in flat_params:
        # Whole parameter arrays resident in VMEM; constant index map -> fetched once.
        in_specs.append(pl.BlockSpec(p.shape, lambda i: (0, 0)))

    out_spec = pl.BlockSpec((tile_n, OUT_PAD), lambda i: (i, 0))

    # Advisory cost estimate for the XLA scheduler.
    macs_per_row = sum(LAYER_DIMS[i] * LAYER_DIMS[i + 1] for i in range(5)) \
        + LAYER_DIMS[5] * OUT_PAD
    trans_per_row = sum(LAYER_DIMS[1:6])          # one erf per hidden activation
    param_bytes = sum(int(p.nbytes) for p in flat_params)
    cost = pl.CostEstimate(
        flops=2 * rows_pad * macs_per_row,
        transcendentals=rows_pad * trans_per_row,
        bytes_accessed=rows_pad * (INPUT_DIMS + OUT_PAD) * 4 + param_bytes,
    )

    y = pl.pallas_call(
        _mlp_kernel,
        out_shape=jax.ShapeDtypeStruct((rows_pad, OUT_PAD), jnp.float32),
        grid_spec=pltpu.PrefetchScalarGridSpec(
            num_scalar_prefetch=0,
            grid=(rows_pad // tile_n,),
            in_specs=in_specs,
            out_specs=out_spec,
        ),
        compiler_params=pltpu.CompilerParams(
            dimension_semantics=("parallel",)),
        cost_estimate=cost,
    )(x, *flat_params)

    y = y[:, :1]               # only column 0 of the padded final layer is real
    return y[:n1], y[n1:n1 + n2]


if __name__ == "__main__":
    key = jax.random.PRNGKey(0)
    kp, k1, k2 = jax.random.split(key, 3)

    params = init_params(kp)

    # 256 rows per input -> 512 fused rows -> 2 parallel grid steps of 256 rows each.
    N = 256
    x1 = jax.random.normal(k1, (N, INPUT_DIMS), dtype=jnp.float32)
    x2 = jax.random.normal(k2, (N, INPUT_DIMS), dtype=jnp.float32)

    y1, y2 = surgeon_trainer_forward(x1, x2, params)
    jax.block_until_ready((y1, y2))

    assert y1.shape == (N, 1) and y2.shape == (N, 1)

    # Plain-JAX f32 reference check (loose tolerance: bf16 matmul operands in kernel).
    def ref_mlp(x):
        h = x
        for i, (w, b) in enumerate(params):
            h = h @ w + b
            if i < 5:
                h = _gelu_exact(h)
        return h

    r1 = ref_mlp(x1)
    r2 = ref_mlp(x2)
    assert float(jnp.max(jnp.abs(y1 - r1))) < 1e-1
    assert float(jnp.max(jnp.abs(y2 - r2))) < 1e-1

    print("KERNEL_OK")
</pallas_src>

<mosaic_0001>
module attributes {stable_mosaic.version = 11 : i64} {
  func.func @_mlp_kernel(%arg0: i32, %arg1: memref<256x8xf32, #tpu.memory_space<vmem>>, %arg2: memref<8x64xbf16, #tpu.memory_space<vmem>>, %arg3: memref<1x64xf32, #tpu.memory_space<vmem>>, %arg4: memref<64x128xbf16, #tpu.memory_space<vmem>>, %arg5: memref<1x128xf32, #tpu.memory_space<vmem>>, %arg6: memref<128x128xbf16, #tpu.memory_space<vmem>>, %arg7: memref<1x128xf32, #tpu.memory_space<vmem>>, %arg8: memref<128x128xbf16, #tpu.memory_space<vmem>>, %arg9: memref<1x128xf32, #tpu.memory_space<vmem>>, %arg10: memref<128x64xbf16, #tpu.memory_space<vmem>>, %arg11: memref<1x64xf32, #tpu.memory_space<vmem>>, %arg12: memref<64x128xbf16, #tpu.memory_space<vmem>>, %arg13: memref<1x128xf32, #tpu.memory_space<vmem>>, %arg14: memref<256x128xf32, #tpu.memory_space<vmem>>) attributes {dimension_semantics = [#tpu.dimension_semantics<parallel>], iteration_bounds = array<i64: 2>, scalar_prefetch = 0 : i64, scratch_operands = 0 : i64, tpu.core_type = #tpu.core_type<tc>, window_params = [{transform_indices = @transform_0, window_bounds = array<i64: 256, 8>}, {pipeline_mode = #tpu.pipeline_mode<synchronous>, transform_indices = @transform_1, window_bounds = array<i64: 8, 64>}, {pipeline_mode = #tpu.pipeline_mode<synchronous>, transform_indices = @transform_2, window_bounds = array<i64: 1, 64>}, {pipeline_mode = #tpu.pipeline_mode<synchronous>, transform_indices = @transform_3, window_bounds = array<i64: 64, 128>}, {pipeline_mode = #tpu.pipeline_mode<synchronous>, transform_indices = @transform_4, window_bounds = array<i64: 1, 128>}, {pipeline_mode = #tpu.pipeline_mode<synchronous>, transform_indices = @transform_5, window_bounds = array<i64: 128, 128>}, {pipeline_mode = #tpu.pipeline_mode<synchronous>, transform_indices = @transform_6, window_bounds = array<i64: 1, 128>}, {pipeline_mode = #tpu.pipeline_mode<synchronous>, transform_indices = @transform_7, window_bounds = array<i64: 128, 128>}, {pipeline_mode = #tpu.pipeline_mode<synchronous>, transform_indices = @transform_8, window_bounds = array<i64: 1, 128>}, {pipeline_mode = #tpu.pipeline_mode<synchronous>, transform_indices = @transform_9, window_bounds = array<i64: 128, 64>}, {pipeline_mode = #tpu.pipeline_mode<synchronous>, transform_indices = @transform_10, window_bounds = array<i64: 1, 64>}, {pipeline_mode = #tpu.pipeline_mode<synchronous>, transform_indices = @transform_11, window_bounds = array<i64: 64, 128>}, {pipeline_mode = #tpu.pipeline_mode<synchronous>, transform_indices = @transform_12, window_bounds = array<i64: 1, 128>}, {transform_indices = @transform_13, window_bounds = array<i64: 256, 128>}]} {
    %c0 = arith.constant 0 : index
    %c0_0 = arith.constant 0 : index
    %0 = vector.load %arg1[%c0, %c0_0] : memref<256x8xf32, #tpu.memory_space<vmem>>, vector<256x8xf32>
    %1 = arith.truncf %0 : vector<256x8xf32> to vector<256x8xbf16>
    %c0_1 = arith.constant 0 : index
    %c0_2 = arith.constant 0 : index
    %2 = vector.load %arg2[%c0_1, %c0_2] : memref<8x64xbf16, #tpu.memory_space<vmem>>, vector<8x64xbf16>
    %cst = arith.constant dense<0.000000e+00> : vector<256x64xf32>
    %3 = tpu.matmul %1, %2, %cst {dimension_numbers = #tpu.dot_dimension_numbers<[1], [0], [0], [1], [0, 0, 1, 1], [], []>} : vector<256x8xbf16>, vector<8x64xbf16>, vector<256x64xf32> -> vector<256x64xf32>
    %c0_3 = arith.constant 0 : index
    %c0_4 = arith.constant 0 : index
    %4 = vector.load %arg3[%c0_3, %c0_4] : memref<1x64xf32, #tpu.memory_space<vmem>>, vector<1x64xf32>
    %5 = vector.broadcast %4 : vector<1x64xf32> to vector<256x64xf32>
    %6 = arith.addf %3, %5 : vector<256x64xf32>
    %cst_5 = arith.constant 5.000000e-01 : f32
    %7 = vector.broadcast %cst_5 : f32 to vector<256x64xf32>
    %8 = arith.mulf %7, %6 : vector<256x64xf32>
    %cst_6 = arith.constant 0.707106769 : f32
    %9 = vector.broadcast %cst_6 : f32 to vector<256x64xf32>
    %10 = arith.mulf %6, %9 : vector<256x64xf32>
    %11 = math.erf %10 : vector<256x64xf32>
    %cst_7 = arith.constant 1.000000e+00 : f32
    %12 = vector.broadcast %cst_7 : f32 to vector<256x64xf32>
    %13 = arith.addf %12, %11 : vector<256x64xf32>
    %14 = arith.mulf %8, %13 : vector<256x64xf32>
    %15 = arith.truncf %14 : vector<256x64xf32> to vector<256x64xbf16>
    %c0_8 = arith.constant 0 : index
    %c0_9 = arith.constant 0 : index
    %16 = vector.load %arg4[%c0_8, %c0_9] : memref<64x128xbf16, #tpu.memory_space<vmem>>, vector<64x128xbf16>
    %cst_10 = arith.constant dense<0.000000e+00> : vector<256x128xf32>
    %17 = tpu.matmul %15, %16, %cst_10 {dimension_numbers = #tpu.dot_dimension_numbers<[1], [0], [0], [1], [0, 0, 1, 1], [], []>} : vector<256x64xbf16>, vector<64x128xbf16>, vector<256x128xf32> -> vector<256x128xf32>
    %c0_11 = arith.constant 0 : index
    %c0_12 = arith.constant 0 : index
    %18 = vector.load %arg5[%c0_11, %c0_12] : memref<1x128xf32, #tpu.memory_space<vmem>>, vector<1x128xf32>
    %19 = vector.broadcast %18 : vector<1x128xf32> to vector<256x128xf32>
    %20 = arith.addf %17, %19 : vector<256x128xf32>
    %cst_13 = arith.constant 5.000000e-01 : f32
    %21 = vector.broadcast %cst_13 : f32 to vector<256x128xf32>
    %22 = arith.mulf %21, %20 : vector<256x128xf32>
    %cst_14 = arith.constant 0.707106769 : f32
    %23 = vector.broadcast %cst_14 : f32 to vector<256x128xf32>
    %24 = arith.mulf %20, %23 : vector<256x128xf32>
    %25 = math.erf %24 : vector<256x128xf32>
    %cst_15 = arith.constant 1.000000e+00 : f32
    %26 = vector.broadcast %cst_15 : f32 to vector<256x128xf32>
    %27 = arith.addf %26, %25 : vector<256x128xf32>
    %28 = arith.mulf %22, %27 : vector<256x128xf32>
    %29 = arith.truncf %28 : vector<256x128xf32> to vector<256x128xbf16>
    %c0_16 = arith.constant 0 : index
    %c0_17 = arith.constant 0 : index
    %30 = vector.load %arg6[%c0_16, %c0_17] : memref<128x128xbf16, #tpu.memory_space<vmem>>, vector<128x128xbf16>
    %cst_18 = arith.constant dense<0.000000e+00> : vector<256x128xf32>
    %31 = tpu.matmul %29, %30, %cst_18 {dimension_numbers = #tpu.dot_dimension_numbers<[1], [0], [0], [1], [0, 0, 1, 1], [], []>} : vector<256x128xbf16>, vector<128x128xbf16>, vector<256x128xf32> -> vector<256x128xf32>
    %c0_19 = arith.constant 0 : index
    %c0_20 = arith.constant 0 : index
    %32 = vector.load %arg7[%c0_19, %c0_20] : memref<1x128xf32, #tpu.memory_space<vmem>>, vector<1x128xf32>
    %33 = vector.broadcast %32 : vector<1x128xf32> to vector<256x128xf32>
    %34 = arith.addf %31, %33 : vector<256x128xf32>
    %cst_21 = arith.constant 5.000000e-01 : f32
    %35 = vector.broadcast %cst_21 : f32 to vector<256x128xf32>
    %36 = arith.mulf %35, %34 : vector<256x128xf32>
    %cst_22 = arith.constant 0.707106769 : f32
    %37 = vector.broadcast %cst_22 : f32 to vector<256x128xf32>
    %38 = arith.mulf %34, %37 : vector<256x128xf32>
    %39 = math.erf %38 : vector<256x128xf32>
    %cst_23 = arith.constant 1.000000e+00 : f32
    %40 = vector.broadcast %cst_23 : f32 to vector<256x128xf32>
    %41 = arith.addf %40, %39 : vector<256x128xf32>
    %42 = arith.mulf %36, %41 : vector<256x128xf32>
    %43 = arith.truncf %42 : vector<256x128xf32> to vector<256x128xbf16>
    %c0_24 = arith.constant 0 : index
    %c0_25 = arith.constant 0 : index
    %44 = vector.load %arg8[%c0_24, %c0_25] : memref<128x128xbf16, #tpu.memory_space<vmem>>, vector<128x128xbf16>
    %cst_26 = arith.constant dense<0.000000e+00> : vector<256x128xf32>
    %45 = tpu.matmul %43, %44, %cst_26 {dimension_numbers = #tpu.dot_dimension_numbers<[1], [0], [0], [1], [0, 0, 1, 1], [], []>} : vector<256x128xbf16>, vector<128x128xbf16>, vector<256x128xf32> -> vector<256x128xf32>
    %c0_27 = arith.constant 0 : index
    %c0_28 = arith.constant 0 : index
    %46 = vector.load %arg9[%c0_27, %c0_28] : memref<1x128xf32, #tpu.memory_space<vmem>>, vector<1x128xf32>
    %47 = vector.broadcast %46 : vector<1x128xf32> to vector<256x128xf32>
    %48 = arith.addf %45, %47 : vector<256x128xf32>
    %cst_29 = arith.constant 5.000000e-01 : f32
    %49 = vector.broadcast %cst_29 : f32 to vector<256x128xf32>
    %50 = arith.mulf %49, %48 : vector<256x128xf32>
    %cst_30 = arith.constant 0.707106769 : f32
    %51 = vector.broadcast %cst_30 : f32 to vector<256x128xf32>
    %52 = arith.mulf %48, %51 : vector<256x128xf32>
    %53 = math.erf %52 : vector<256x128xf32>
    %cst_31 = arith.constant 1.000000e+00 : f32
    %54 = vector.broadcast %cst_31 : f32 to vector<256x128xf32>
    %55 = arith.addf %54, %53 : vector<256x128xf32>
    %56 = arith.mulf %50, %55 : vector<256x128xf32>
    %57 = arith.truncf %56 : vector<256x128xf32> to vector<256x128xbf16>
    %c0_32 = arith.constant 0 : index
    %c0_33 = arith.constant 0 : index
    %58 = vector.load %arg10[%c0_32, %c0_33] : memref<128x64xbf16, #tpu.memory_space<vmem>>, vector<128x64xbf16>
    %cst_34 = arith.constant dense<0.000000e+00> : vector<256x64xf32>
    %59 = tpu.matmul %57, %58, %cst_34 {dimension_numbers = #tpu.dot_dimension_numbers<[1], [0], [0], [1], [0, 0, 1, 1], [], []>} : vector<256x128xbf16>, vector<128x64xbf16>, vector<256x64xf32> -> vector<256x64xf32>
    %c0_35 = arith.constant 0 : index
    %c0_36 = arith.constant 0 : index
    %60 = vector.load %arg11[%c0_35, %c0_36] : memref<1x64xf32, #tpu.memory_space<vmem>>, vector<1x64xf32>
    %61 = vector.broadcast %60 : vector<1x64xf32> to vector<256x64xf32>
    %62 = arith.addf %59, %61 : vector<256x64xf32>
    %cst_37 = arith.constant 5.000000e-01 : f32
    %63 = vector.broadcast %cst_37 : f32 to vector<256x64xf32>
    %64 = arith.mulf %63, %62 : vector<256x64xf32>
    %cst_38 = arith.constant 0.707106769 : f32
    %65 = vector.broadcast %cst_38 : f32 to vector<256x64xf32>
    %66 = arith.mulf %62, %65 : vector<256x64xf32>
    %67 = math.erf %66 : vector<256x64xf32>
    %cst_39 = arith.constant 1.000000e+00 : f32
    %68 = vector.broadcast %cst_39 : f32 to vector<256x64xf32>
    %69 = arith.addf %68, %67 : vector<256x64xf32>
    %70 = arith.mulf %64, %69 : vector<256x64xf32>
    %71 = arith.truncf %70 : vector<256x64xf32> to vector<256x64xbf16>
    %c0_40 = arith.constant 0 : index
    %c0_41 = arith.constant 0 : index
    %72 = vector.load %arg12[%c0_40, %c0_41] : memref<64x128xbf16, #tpu.memory_space<vmem>>, vector<64x128xbf16>
    %cst_42 = arith.constant dense<0.000000e+00> : vector<256x128xf32>
    %73 = tpu.matmul %71, %72, %cst_42 {dimension_numbers = #tpu.dot_dimension_numbers<[1], [0], [0], [1], [0, 0, 1, 1], [], []>} : vector<256x64xbf16>, vector<64x128xbf16>, vector<256x128xf32> -> vector<256x128xf32>
    %c0_43 = arith.constant 0 : index
    %c0_44 = arith.constant 0 : index
    %74 = vector.load %arg13[%c0_43, %c0_44] : memref<1x128xf32, #tpu.memory_space<vmem>>, vector<1x128xf32>
    %75 = vector.broadcast %74 : vector<1x128xf32> to vector<256x128xf32>
    %76 = arith.addf %73, %75 : vector<256x128xf32>
    %c0_45 = arith.constant 0 : index
    %c0_46 = arith.constant 0 : index
    %77 = vector.load %arg14[%c0_45, %c0_46] : memref<256x128xf32, #tpu.memory_space<vmem>>, vector<256x128xf32>
    tpu.vector_store %arg14[%c0_45, %c0_46], %76 {strides = array<i32>} : memref<256x128xf32, #tpu.memory_space<vmem>>, vector<256x128xf32>,
    return
  }
  func.func @transform_0(%arg0: i32) -> (i32, i32) {
    %c0_i32 = arith.constant 0 : i32
    %c0_i32_0 = arith.constant 0 : i32
    return %arg0, %c0_i32 : i32, i32
  }
  func.func @transform_1(%arg0: i32) -> (i32, i32) {
    %c0_i32 = arith.constant 0 : i32
    %c0_i32_0 = arith.constant 0 : i32
    %c0_i32_1 = arith.constant 0 : i32
    return %c0_i32, %c0_i32_0 : i32, i32
  }
  func.func @transform_2(%arg0: i32) -> (i32, i32) {
    %c0_i32 = arith.constant 0 : i32
    %c0_i32_0 = arith.constant 0 : i32
    %c0_i32_1 = arith.constant 0 : i32
    return %c0_i32, %c0_i32_0 : i32, i32
  }
  func.func @transform_3(%arg0: i32) -> (i32, i32) {
    %c0_i32 = arith.constant 0 : i32
    %c0_i32_0 = arith.constant 0 : i32
    %c0_i32_1 = arith.constant 0 : i32
    return %c0_i32, %c0_i32_0 : i32, i32
  }
  func.func @transform_4(%arg0: i32) -> (i32, i32) {
    %c0_i32 = arith.constant 0 : i32
    %c0_i32_0 = arith.constant 0 : i32
    %c0_i32_1 = arith.constant 0 : i32
    return %c0_i32, %c0_i32_0 : i32, i32
  }
  func.func @transform_5(%arg0: i32) -> (i32, i32) {
    %c0_i32 = arith.constant 0 : i32
    %c0_i32_0 = arith.constant 0 : i32
    %c0_i32_1 = arith.constant 0 : i32
    return %c0_i32, %c0_i32_0 : i32, i32
  }
  func.func @transform_6(%arg0: i32) -> (i32, i32) {
    %c0_i32 = arith.constant 0 : i32
    %c0_i32_0 = arith.constant 0 : i32
    %c0_i32_1 = arith.constant 0 : i32
    return %c0_i32, %c0_i32_0 : i32, i32
  }
  func.func @transform_7(%arg0: i32) -> (i32, i32) {
    %c0_i32 = arith.constant 0 : i32
    %c0_i32_0 = arith.constant 0 : i32
    %c0_i32_1 = arith.constant 0 : i32
    return %c0_i32, %c0_i32_0 : i32, i32
  }
  func.func @transform_8(%arg0: i32) -> (i32, i32) {
    %c0_i32 = arith.constant 0 : i32
    %c0_i32_0 = arith.constant 0 : i32
    %c0_i32_1 = arith.constant 0 : i32
    return %c0_i32, %c0_i32_0 : i32, i32
  }
  func.func @transform_9(%arg0: i32) -> (i32, i32) {
    %c0_i32 = arith.constant 0 : i32
    %c0_i32_0 = arith.constant 0 : i32
    %c0_i32_1 = arith.constant 0 : i32
    return %c0_i32, %c0_i32_0 : i32, i32
  }
  func.func @transform_10(%arg0: i32) -> (i32, i32) {
    %c0_i32 = arith.constant 0 : i32
    %c0_i32_0 = arith.constant 0 : i32
    %c0_i32_1 = arith.constant 0 : i32
    return %c0_i32, %c0_i32_0 : i32, i32
  }
  func.func @transform_11(%arg0: i32) -> (i32, i32) {
    %c0_i32 = arith.constant 0 : i32
    %c0_i32_0 = arith.constant 0 : i32
    %c0_i32_1 = arith.constant 0 : i32
    return %c0_i32, %c0_i32_0 : i32, i32
  }
  func.func @transform_12(%arg0: i32) -> (i32, i32) {
    %c0_i32 = arith.constant 0 : i32
    %c0_i32_0 = arith.constant 0 : i32
    %c0_i32_1 = arith.constant 0 : i32
    return %c0_i32, %c0_i32_0 : i32, i32
  }
  func.func @transform_13(%arg0: i32) -> (i32, i32) {
    %c0_i32 = arith.constant 0 : i32
    %c0_i32_0 = arith.constant 0 : i32
    return %arg0, %c0_i32 : i32, i32
  }
}

</mosaic_0001>

<llo_original>
// kernel: tpu_custom_call.1
$region0: #{tpu_custom_call.1}
  #allocation0 [shape = 'u32[]', space=smem, size = 0x4, offset = 0x4, fixed_abs, tag = 'smem constant byte address 0x4 - core index']
  #allocation1 [shape = 'u32[144,128]{1,0:T(1,128)}', space=vmem, size = 0x12000, scoped, tag = 'internal scratch']
  %s0 = inlined_call_operand.vmem [shape: f32[512,8], index: 0, kind: input, shape index: {}]
  %s1 = inlined_call_operand.vmem [shape: bf16[8,64], index: 1, kind: input, shape index: {}]
  %s2 = inlined_call_operand.vmem [shape: f32[1,64], index: 2, kind: input, shape index: {}]
  %s3 = inlined_call_operand.vmem [shape: bf16[64,128], index: 3, kind: input, shape index: {}]
  %s4 = inlined_call_operand.vmem [shape: f32[1,128], index: 4, kind: input, shape index: {}]
  %s5 = inlined_call_operand.vmem [shape: bf16[128,128], index: 5, kind: input, shape index: {}]
  %s6 = inlined_call_operand.vmem [shape: f32[1,128], index: 6, kind: input, shape index: {}]
  %s7 = inlined_call_operand.vmem [shape: bf16[128,128], index: 7, kind: input, shape index: {}]
  %s8 = inlined_call_operand.vmem [shape: f32[1,128], index: 8, kind: input, shape index: {}]
  %s9 = inlined_call_operand.vmem [shape: bf16[128,64], index: 9, kind: input, shape index: {}]
  %s10 = inlined_call_operand.vmem [shape: f32[1,64], index: 10, kind: input, shape index: {}]
  %s11 = inlined_call_operand.vmem [shape: bf16[64,128], index: 11, kind: input, shape index: {}]
  %s12 = inlined_call_operand.vmem [shape: f32[1,128], index: 12, kind: input, shape index: {}]
  %s13 = inlined_call_operand.hbm [shape: f32[512,128], index: 13, kind: output, shape index: {}]
  %s14 = sld [smem:[#allocation0]]
  $region85: #{tpu_custom_call.1} parent=0
    _
  %s16 = ssub.s32 1, %s14
  %s17 = scalar_select 0, %s16, %s14
  $region1: #{tpu_custom_call.1} parent=0
    #allocation2 [shape = 'u8[262144]{0}', space=vmem, size = 0x40000, scoped, tag = 'output window, operand 0']
    #allocation3 [shape = 's32[2]{0}', space=sflag, size = 0x8, scoped, tag = 'scoped memory for tpu_custom_call.1']
    %18 = vsyncpa [#allocation3], 0
    %s19 = scalar_lea.sflag [#allocation3], 1
    %20 = vsyncpa %s19, 0
    loop: start=0, step=1, limit=4
    $region2: #{tpu_custom_call.1} parent=1 // loop_pre_header
      _
    $region3: #{tpu_custom_call.1} parent=1 // loop_header
      %s22 = sphi 0, %s26
      %p23 = scmp.ge.s32.totalorder %s22, 4
      %s32 = sphi 0, %s34
      %s35 = sphi 0, %s32
      %s36 = sphi 0, %s35
      %s52 = sphi 0, %s36
      %s56 = sphi 0, %s56
      %s58 = sphi 0, %s56
      %s59 = sphi 0, %s58
      %s73 = sphi 0, %s59
      %s77 = sphi 0, %s77
      %s79 = sphi 0, %s77
      %s80 = sphi 0, %s79
      %s94 = sphi 0, %s80
      %s98 = sphi 0, %s98
      %s100 = sphi 0, %s98
      %s101 = sphi 0, %s100
      %s115 = sphi 0, %s101
      %s119 = sphi 0, %s119
      %s121 = sphi 0, %s119
      %s122 = sphi 0, %s121
      %s136 = sphi 0, %s122
      %s140 = sphi 0, %s140
      %s142 = sphi 0, %s140
      %s143 = sphi 0, %s142
      %s157 = sphi 0, %s143
      %s161 = sphi 0, %s161
      %s163 = sphi 0, %s161
      %s164 = sphi 0, %s163
      %s178 = sphi 0, %s164
      %s182 = sphi 0, %s182
      %s184 = sphi 0, %s182
      %s185 = sphi 0, %s184
      %s199 = sphi 0, %s185
      %s203 = sphi 0, %s203
      %s205 = sphi 0, %s203
      %s206 = sphi 0, %s205
      %s220 = sphi 0, %s206
      %s224 = sphi 0, %s224
      %s226 = sphi 0, %s224
      %s227 = sphi 0, %s226
      %s241 = sphi 0, %s227
      %s245 = sphi 0, %s245
      %s247 = sphi 0, %s245
      %s248 = sphi 0, %s247
      %s262 = sphi 0, %s248
      %s266 = sphi 0, %s266
      %s268 = sphi 0, %s266
      %s269 = sphi 0, %s268
      %s283 = sphi 0, %s269
      %s287 = sphi 0, %s287
      %s289 = sphi 0, %s287
      %s290 = sphi 0, %s289
      %s304 = sphi 0, %s290
      %s310 = sphi 0, %s312
      %s313 = sphi 0, %s310
      %s314 = sphi 0, %s313
      %s330 = sphi 0, %s314
    $region4: #{tpu_custom_call.1} parent=1 // loop_header_branch
      %25 = sbr.rel (%p23) target = $region8
    $region5: #{tpu_custom_call.1} parent=1 // loop_body
      %s27 = ssub.s32 %s22, 1
      %s28 = ssub.s32 %s22, 2
      %s29 = sadd.s32 %s22, 1
      %s30 = ssub.s32 %s22, %s29
      %p31 = scmp.eq.s32.totalorder %s30, 0
      %s33 = sadd.s32 %s32, 1
      %s34 = scalar_select %p31, %s32, %s33
      %p37 = pneg %p31
      %p38 = scmp.eq.s32.totalorder %s22, 1
      %p39 = por %p37, %p38
      %p40 = scmp.ne.s32.totalorder %s32, %s35
      %p41 = scmp.eq.s32.totalorder %s22, 0
      %p42 = por %p40, %p41
      %p43 = scmp.ne.s32.totalorder %s32, %s35
      %p44 = scmp.eq.s32.totalorder %s27, 1
      %p45 = por %p43, %p44
      %p46 = scmp.ne.s32.totalorder %s35, %s36
      %p47 = scmp.eq.s32.totalorder %s27, 0
      %p48 = por %p46, %p47
      %p49 = scmp.ne.s32.totalorder %s35, %s36
      %p50 = scmp.eq.s32.totalorder %s28, 1
      %p51 = por %p49, %p50
      %p53 = scmp.ne.s32.totalorder %s36, %s52
      %p54 = scmp.eq.s32.totalorder %s28, 0
      %p55 = por %p53, %p54
      %s57 = sadd.s32 %s56, 1
      %p60 = scmp.eq.s32.totalorder %s22, 1
      %p61 = scmp.ne.s32.totalorder %s56, %s58
      %p62 = scmp.eq.s32.totalorder %s22, 0
      %p63 = por %p61, %p62
      %p64 = scmp.ne.s32.totalorder %s56, %s58
      %p65 = scmp.eq.s32.totalorder %s27, 1
      %p66 = por %p64, %p65
      %p67 = scmp.ne.s32.totalorder %s58, %s59
      %p68 = scmp.eq.s32.totalorder %s27, 0
      %p69 = por %p67, %p68
      %p70 = scmp.ne.s32.totalorder %s58, %s59
      %p71 = scmp.eq.s32.totalorder %s28, 1
      %p72 = por %p70, %p71
      %p74 = scmp.ne.s32.totalorder %s59, %s73
      %p75 = scmp.eq.s32.totalorder %s28, 0
      %p76 = por %p74, %p75
      %s78 = sadd.s32 %s77, 1
      %p81 = scmp.eq.s32.totalorder %s22, 1
      %p82 = scmp.ne.s32.totalorder %s77, %s79
      %p83 = scmp.eq.s32.totalorder %s22, 0
      %p84 = por %p82, %p83
      %p85 = scmp.ne.s32.totalorder %s77, %s79
      %p86 = scmp.eq.s32.totalorder %s27, 1
      %p87 = por %p85, %p86
      %p88 = scmp.ne.s32.totalorder %s79, %s80
      %p89 = scmp.eq.s32.totalorder %s27, 0
      %p90 = por %p88, %p89
      %p91 = scmp.ne.s32.totalorder %s79, %s80
      %p92 = scmp.eq.s32.totalorder %s28, 1
      %p93 = por %p91, %p92
      %p95 = scmp.ne.s32.totalorder %s80, %s94
      %p96 = scmp.eq.s32.totalorder %s28, 0
      %p97 = por %p95, %p96
      %s99 = sadd.s32 %s98, 1
      %p102 = scmp.eq.s32.totalorder %s22, 1
      %p103 = scmp.ne.s32.totalorder %s98, %s100
      %p104 = scmp.eq.s32.totalorder %s22, 0
      %p105 = por %p103, %p104
      %p106 = scmp.ne.s32.totalorder %s98, %s100
      %p107 = scmp.eq.s32.totalorder %s27, 1
      %p108 = por %p106, %p107
      %p109 = scmp.ne.s32.totalorder %s100, %s101
      %p110 = scmp.eq.s32.totalorder %s27, 0
      %p111 = por %p109, %p110
      %p112 = scmp.ne.s32.totalorder %s100, %s101
      %p113 = scmp.eq.s32.totalorder %s28, 1
      %p114 = por %p112, %p113
      %p116 = scmp.ne.s32.totalorder %s101, %s115
      %p117 = scmp.eq.s32.totalorder %s28, 0
      %p118 = por %p116, %p117
      %s120 = sadd.s32 %s119, 1
      %p123 = scmp.eq.s32.totalorder %s22, 1
      %p124 = scmp.ne.s32.totalorder %s119, %s121
      %p125 = scmp.eq.s32.totalorder %s22, 0
      %p126 = por %p124, %p125
      %p127 = scmp.ne.s32.totalorder %s119, %s121
      %p128 = scmp.eq.s32.totalorder %s27, 1
      %p129 = por %p127, %p128
      %p130 = scmp.ne.s32.totalorder %s121, %s122
      %p131 = scmp.eq.s32.totalorder %s27, 0
      %p132 = por %p130, %p131
      %p133 = scmp.ne.s32.totalorder %s121, %s122
      %p134 = scmp.eq.s32.totalorder %s28, 1
      %p135 = por %p133, %p134
      %p137 = scmp.ne.s32.totalorder %s122, %s136
      %p138 = scmp.eq.s32.totalorder %s28, 0
      %p139 = por %p137, %p138
      %s141 = sadd.s32 %s140, 1
      %p144 = scmp.eq.s32.totalorder %s22, 1
      %p145 = scmp.ne.s32.totalorder %s140, %s142
      %p146 = scmp.eq.s32.totalorder %s22, 0
      %p147 = por %p145, %p146
      %p148 = scmp.ne.s32.totalorder %s140, %s142
      %p149 = scmp.eq.s32.totalorder %s27, 1
      %p150 = por %p148, %p149
      %p151 = scmp.ne.s32.totalorder %s142, %s143
      %p152 = scmp.eq.s32.totalorder %s27, 0
      %p153 = por %p151, %p152
      %p154 = scmp.ne.s32.totalorder %s142, %s143
      %p155 = scmp.eq.s32.totalorder %s28, 1
      %p156 = por %p154, %p155
      %p158 = scmp.ne.s32.totalorder %s143, %s157
      %p159 = scmp.eq.s32.totalorder %s28, 0
      %p160 = por %p158, %p159
      %s162 = sadd.s32 %s161, 1
      %p165 = scmp.eq.s32.totalorder %s22, 1
      %p166 = scmp.ne.s32.totalorder %s161, %s163
      %p167 = scmp.eq.s32.totalorder %s22, 0
      %p168 = por %p166, %p167
      %p169 = scmp.ne.s32.totalorder %s161, %s163
      %p170 = scmp.eq.s32.totalorder %s27, 1
      %p171 = por %p169, %p170
      %p172 = scmp.ne.s32.totalorder %s163, %s164
      %p173 = scmp.eq.s32.totalorder %s27, 0
      %p174 = por %p172, %p173
      %p175 = scmp.ne.s32.totalorder %s163, %s164
      %p176 = scmp.eq.s32.totalorder %s28, 1
      %p177 = por %p175, %p176
      %p179 = scmp.ne.s32.totalorder %s164, %s178
      %p180 = scmp.eq.s32.totalorder %s28, 0
      %p181 = por %p179, %p180
      %s183 = sadd.s32 %s182, 1
      %p186 = scmp.eq.s32.totalorder %s22, 1
      %p187 = scmp.ne.s32.totalorder %s182, %s184
      %p188 = scmp.eq.s32.totalorder %s22, 0
      %p189 = por %p187, %p188
      %p190 = scmp.ne.s32.totalorder %s182, %s184
      %p191 = scmp.eq.s32.totalorder %s27, 1
      %p192 = por %p190, %p191
      %p193 = scmp.ne.s32.totalorder %s184, %s185
      %p194 = scmp.eq.s32.totalorder %s27, 0
      %p195 = por %p193, %p194
      %p196 = scmp.ne.s32.totalorder %s184, %s185
      %p197 = scmp.eq.s32.totalorder %s28, 1
      %p198 = por %p196, %p197
      %p200 = scmp.ne.s32.totalorder %s185, %s199
      %p201 = scmp.eq.s32.totalorder %s28, 0
      %p202 = por %p200, %p201
      %s204 = sadd.s32 %s203, 1
      %p207 = scmp.eq.s32.totalorder %s22, 1
      %p208 = scmp.ne.s32.totalorder %s203, %s205
      %p209 = scmp.eq.s32.totalorder %s22, 0
      %p210 = por %p208, %p209
      %p211 = scmp.ne.s32.totalorder %s203, %s205
      %p212 = scmp.eq.s32.totalorder %s27, 1
      %p213 = por %p211, %p212
      %p214 = scmp.ne.s32.totalorder %s205, %s206
      %p215 = scmp.eq.s32.totalorder %s27, 0
      %p216 = por %p214, %p215
      %p217 = scmp.ne.s32.totalorder %s205, %s206
      %p218 = scmp.eq.s32.totalorder %s28, 1
      %p219 = por %p217, %p218
      %p221 = scmp.ne.s32.totalorder %s206, %s220
      %p222 = scmp.eq.s32.totalorder %s28, 0
      %p223 = por %p221, %p222
      %s225 = sadd.s32 %s224, 1
      %p228 = scmp.eq.s32.totalorder %s22, 1
      %p229 = scmp.ne.s32.totalorder %s224, %s226
      %p230 = scmp.eq.s32.totalorder %s22, 0
      %p231 = por %p229, %p230
      %p232 = scmp.ne.s32.totalorder %s224, %s226
      %p233 = scmp.eq.s32.totalorder %s27, 1
      %p234 = por %p232, %p233
      %p235 = scmp.ne.s32.totalorder %s226, %s227
      %p236 = scmp.eq.s32.totalorder %s27, 0
      %p237 = por %p235, %p236
      %p238 = scmp.ne.s32.totalorder %s226, %s227
      %p239 = scmp.eq.s32.totalorder %s28, 1
      %p240 = por %p238, %p239
      %p242 = scmp.ne.s32.totalorder %s227, %s241
      %p243 = scmp.eq.s32.totalorder %s28, 0
      %p244 = por %p242, %p243
      %s246 = sadd.s32 %s245, 1
      %p249 = scmp.eq.s32.totalorder %s22, 1
      %p250 = scmp.ne.s32.totalorder %s245, %s247
      %p251 = scmp.eq.s32.totalorder %s22, 0
      %p252 = por %p250, %p251
      %p253 = scmp.ne.s32.totalorder %s245, %s247
      %p254 = scmp.eq.s32.totalorder %s27, 1
      %p255 = por %p253, %p254
      %p256 = scmp.ne.s32.totalorder %s247, %s248
      %p257 = scmp.eq.s32.totalorder %s27, 0
      %p258 = por %p256, %p257
      %p259 = scmp.ne.s32.totalorder %s247, %s248
      %p260 = scmp.eq.s32.totalorder %s28, 1
      %p261 = por %p259, %p260
      %p263 = scmp.ne.s32.totalorder %s248, %s262
      %p264 = scmp.eq.s32.totalorder %s28, 0
      %p265 = por %p263, %p264
      %s267 = sadd.s32 %s266, 1
      %p270 = scmp.eq.s32.totalorder %s22, 1
      %p271 = scmp.ne.s32.totalorder %s266, %s268
      %p272 = scmp.eq.s32.totalorder %s22, 0
      %p273 = por %p271, %p272
      %p274 = scmp.ne.s32.totalorder %s266, %s268
      %p275 = scmp.eq.s32.totalorder %s27, 1
      %p276 = por %p274, %p275
      %p277 = scmp.ne.s32.totalorder %s268, %s269
      %p278 = scmp.eq.s32.totalorder %s27, 0
      %p279 = por %p277, %p278
      %p280 = scmp.ne.s32.totalorder %s268, %s269
      %p281 = scmp.eq.s32.totalorder %s28, 1
      %p282 = por %p280, %p281
      %p284 = scmp.ne.s32.totalorder %s269, %s283
      %p285 = scmp.eq.s32.totalorder %s28, 0
      %p286 = por %p284, %p285
      %s288 = sadd.s32 %s287, 1
      %p291 = scmp.eq.s32.totalorder %s22, 1
      %p292 = scmp.ne.s32.totalorder %s287, %s289
      %p293 = scmp.eq.s32.totalorder %s22, 0
      %p294 = por %p292, %p293
      %p295 = scmp.ne.s32.totalorder %s287, %s289
      %p296 = scmp.eq.s32.totalorder %s27, 1
      %p297 = por %p295, %p296
      %p298 = scmp.ne.s32.totalorder %s289, %s290
      %p299 = scmp.eq.s32.totalorder %s27, 0
      %p300 = por %p298, %p299
      %p301 = scmp.ne.s32.totalorder %s289, %s290
      %p302 = scmp.eq.s32.totalorder %s28, 1
      %p303 = por %p301, %p302
      %p305 = scmp.ne.s32.totalorder %s290, %s304
      %p306 = scmp.eq.s32.totalorder %s28, 0
      %p307 = por %p305, %p306
      %s308 = ssub.s32 %s22, %s29
      %p309 = scmp.eq.s32.totalorder %s308, 0
      %s311 = sadd.s32 %s310, 1
      %s312 = scalar_select %p309, %s310, %s311
      %p315 = pneg %p309
      %p316 = scmp.eq.s32.totalorder %s22, 1
      %p317 = por %p315, %p316
      %p318 = scmp.ne.s32.totalorder %s310, %s313
      %p319 = scmp.eq.s32.totalorder %s22, 0
      %p320 = por %p318, %p319
      %p321 = scmp.ne.s32.totalorder %s310, %s313
      %p322 = scmp.eq.s32.totalorder %s27, 1
      %p323 = por %p321, %p322
      %p324 = scmp.ne.s32.totalorder %s313, %s314
      %p325 = scmp.eq.s32.totalorder %s27, 0
      %p326 = por %p324, %p325
      %p327 = scmp.ne.s32.totalorder %s313, %s314
      %p328 = scmp.eq.s32.totalorder %s28, 1
      %p329 = por %p327, %p328
      %p331 = scmp.ne.s32.totalorder %s314, %s330
      %p332 = scmp.eq.s32.totalorder %s28, 0
      %p333 = por %p331, %p332
      %p334 = scmp.le.s32.totalorder 1, %s22
      %p335 = scmp.lt.s32.totalorder %s22, 3
      %p336 = pnand %p334, %p335
      %p337 = pneg %p336
      // Predicated region
      $region9: #{tpu_custom_call.1} parent=5 // pred_check
        _
      $region10: #{tpu_custom_call.1} parent=5 // pred_check_branch
        %339 = sbr.rel (%p336) target = $region12
      $region11: #{tpu_custom_call.1} parent=5 // pred_region
        %s340 = ssub.s32 %s22, 1
        // Predicated region
        $region13: #{tpu_custom_call.1} parent=11 // pred_check
          %p341 = pneg %p69
        $region14: #{tpu_custom_call.1} parent=11 // pred_check_branch
          %343 = sbr.rel (%p341) target = $region16
        $region15: #{tpu_custom_call.1} parent=11 // pred_region
          _
        $region16: #{tpu_custom_call.1} parent=11 // pred_fallthru
          _
        // Predicated region
        $region17: #{tpu_custom_call.1} parent=11 // pred_check
          %p344 = pneg %p90
        $region18: #{tpu_custom_call.1} parent=11 // pred_check_branch
          %346 = sbr.rel (%p344) target = $region20
        $region19: #{tpu_custom_call.1} parent=11 // pred_region
          _
        $region20: #{tpu_custom_call.1} parent=11 // pred_fallthru
          _
        // Predicated region
        $region21: #{tpu_custom_call.1} parent=11 // pred_check
          %p347 = pneg %p111
        $region22: #{tpu_custom_call.1} parent=11 // pred_check_branch
          %349 = sbr.rel (%p347) target = $region24
        $region23: #{tpu_custom_call.1} parent=11 // pred_region
          _
        $region24: #{tpu_custom_call.1} parent=11 // pred_fallthru
          _
        // Predicated region
        $region25: #{tpu_custom_call.1} parent=11 // pred_check
          %p350 = pneg %p132
        $region26: #{tpu_custom_call.1} parent=11 // pred_check_branch
          %352 = sbr.rel (%p350) target = $region28
        $region27: #{tpu_custom_call.1} parent=11 // pred_region
          _
        $region28: #{tpu_custom_call.1} parent=11 // pred_fallthru
          _
        // Predicated region
        $region29: #{tpu_custom_call.1} parent=11 // pred_check
          %p353 = pneg %p153
        $region30: #{tpu_custom_call.1} parent=11 // pred_check_branch
          %355 = sbr.rel (%p353) target = $region32
        $region31: #{tpu_custom_call.1} parent=11 // pred_region
          _
        $region32: #{tpu_custom_call.1} parent=11 // pred_fallthru
          _
        // Predicated region
        $region33: #{tpu_custom_call.1} parent=11 // pred_check
          %p356 = pneg %p174
        $region34: #{tpu_custom_call.1} parent=11 // pred_check_branch
          %358 = sbr.rel (%p356) target = $region36
        $region35: #{tpu_custom_call.1} parent=11 // pred_region
          _
        $region36: #{tpu_custom_call.1} parent=11 // pred_fallthru
          _
        // Predicated region
        $region37: #{tpu_custom_call.1} parent=11 // pred_check
          %p359 = pneg %p195
        $region38: #{tpu_custom_call.1} parent=11 // pred_check_branch
          %361 = sbr.rel (%p359) target = $region40
        $region39: #{tpu_custom_call.1} parent=11 // pred_region
          _
        $region40: #{tpu_custom_call.1} parent=11 // pred_fallthru
          _
        // Predicated region
        $region41: #{tpu_custom_call.1} parent=11 // pred_check
          %p362 = pneg %p216
        $region42: #{tpu_custom_call.1} parent=11 // pred_check_branch
          %364 = sbr.rel (%p362) target = $region44
        $region43: #{tpu_custom_call.1} parent=11 // pred_region
          _
        $region44: #{tpu_custom_call.1} parent=11 // pred_fallthru
          _
        // Predicated region
        $region45: #{tpu_custom_call.1} parent=11 // pred_check
          %p365 = pneg %p237
        $region46: #{tpu_custom_call.1} parent=11 // pred_check_branch
          %367 = sbr.rel (%p365) target = $region48
        $region47: #{tpu_custom_call.1} parent=11 // pred_region
          _
        $region48: #{tpu_custom_call.1} parent=11 // pred_fallthru
          _
        // Predicated region
        $region49: #{tpu_custom_call.1} parent=11 // pred_check
          %p368 = pneg %p258
        $region50: #{tpu_custom_call.1} parent=11 // pred_check_branch
          %370 = sbr.rel (%p368) target = $region52
        $region51: #{tpu_custom_call.1} parent=11 // pred_region
          _
        $region52: #{tpu_custom_call.1} parent=11 // pred_fallthru
          _
        // Predicated region
        $region53: #{tpu_custom_call.1} parent=11 // pred_check
          %p371 = pneg %p279
        $region54: #{tpu_custom_call.1} parent=11 // pred_check_branch
          %373 = sbr.rel (%p371) target = $region56
        $region55: #{tpu_custom_call.1} parent=11 // pred_region
          _
        $region56: #{tpu_custom_call.1} parent=11 // pred_fallthru
          _
        // Predicated region
        $region57: #{tpu_custom_call.1} parent=11 // pred_check
          %p374 = pneg %p300
        $region58: #{tpu_custom_call.1} parent=11 // pred_check_branch
          %376 = sbr.rel (%p374) target = $region60
        $region59: #{tpu_custom_call.1} parent=11 // pred_region
          _
        $region60: #{tpu_custom_call.1} parent=11 // pred_fallthru
          _
      $region12: #{tpu_custom_call.1} parent=5 // pred_fallthru
        _
      %p377 = scmp.lt.s32.totalorder %s22, 2
      // Predicated region
      $region61: #{tpu_custom_call.1} parent=5 // pred_check
        %p378 = pneg %p377
      $region62: #{tpu_custom_call.1} parent=5 // pred_check_branch
        %380 = sbr.rel (%p378) target = $region64
      $region63: #{tpu_custom_call.1} parent=5 // pred_region
        // Predicated region
        $region65: #{tpu_custom_call.1} parent=63 // pred_check
          %p381 = pneg %p42
        $region66: #{tpu_custom_call.1} parent=63 // pred_check_branch
          %383 = sbr.rel (%p381) target = $region68
        $region67: #{tpu_custom_call.1} parent=63 // pred_region
          %s384 = smul.u32 32, %s22
          %p385 = scmp.lt.s32.totalorder %s384, 63
          %s386 = scalar_select %p385, %s384, 63
          %s387 = smul.addr %s386, 8
          %s388 = scalar_lea.vmem %s0, %s387
          %s389 = smul.u32 32, %s22
        $region68: #{tpu_custom_call.1} parent=63 // pred_fallthru
          _
      $region64: #{tpu_custom_call.1} parent=5 // pred_fallthru
        _
      %p390 = scmp.le.s32.totalorder 1, %s22
      %p391 = scmp.lt.s32.totalorder %s22, 3
      %p392 = pnand %p390, %p391
      %p393 = pneg %p392
      // Predicated region
      $region69: #{tpu_custom_call.1} parent=5 // pred_check
        _
      $region70: #{tpu_custom_call.1} parent=5 // pred_check_branch
        %395 = sbr.rel (%p392) target = $region72
      $region71: #{tpu_custom_call.1} parent=5 // pred_region
        %s396 = ssub.s32 %s22, 1
        %s397 = smul.u32 32, %s27
        %p398 = scmp.lt.s32.totalorder %s397, 63
        %s399 = scalar_select %p398, %s397, 63
        %s400 = smul.addr %s399, 8
        %s401 = scalar_lea.vmem %s0, %s400
        %p402 = pneg %p48
        %p403 = pneg %p45
        %p404 = pneg %p69
        %p405 = pneg %p66
        %p406 = pneg %p90
        %p407 = pneg %p87
        %p408 = pneg %p111
        %p409 = pneg %p108
        %p410 = pneg %p132
        %p411 = pneg %p129
        %p412 = pneg %p153
        %p413 = pneg %p150
        %p414 = pneg %p174
        %p415 = pneg %p171
        %p416 = pneg %p195
        %p417 = pneg %p192
        %p418 = pneg %p216
        %p419 = pneg %p213
        %p420 = pneg %p237
        %p421 = pneg %p234
        %p422 = pneg %p258
        %p423 = pneg %p255
        %p424 = pneg %p279
        %p425 = pneg %p276
        %p426 = pneg %p300
        %p427 = pneg %p297
        %p428 = pneg %p326
        %p429 = pneg %p323
        %s430 = sand.u32 %s313, 1
        %s431 = scalar_lea.sflag [#allocation3], %s430
        %s432 = sand.u32 %s313, 1
        %s433 = smul.addr %s432, 256
        %s434 = scalar_lea.vmem [#allocation2], %s433
        %s435 = smul.u32 32, %s27
        %p436 = scmp.lt.s32.totalorder %s435, 63
        %s437 = scalar_select %p436, %s435, 63
        %s438 = smul.addr %s437, 8
        %s439 = scalar_lea.vmem %s0, %s438
        %s440 = smul.u32 32, %s27
        %s441 = smul.u32 32, %s27
        %v443 = vld [vmem:[%s439] sm:$0xff]
        %v444 = vld [vmem:[%s439 + $0x8] sm:$0xff]
        %v445 = vld [vmem:[%s439 + $0x10] sm:$0xff]
        %v446 = vld [vmem:[%s439 + $0x18] sm:$0xff]
        %v447 = vld [vmem:[%s439 + $0x20] sm:$0xff]
        %v448 = vld [vmem:[%s439 + $0x28] sm:$0xff]
        %v449 = vld [vmem:[%s439 + $0x30] sm:$0xff]
        %v450 = vld [vmem:[%s439 + $0x38] sm:$0xff]
        %v451 = vld [vmem:[%s439 + $0x40] sm:$0xff]
        %v452 = vld [vmem:[%s439 + $0x48] sm:$0xff]
        %v453 = vld [vmem:[%s439 + $0x50] sm:$0xff]
        %v454 = vld [vmem:[%s439 + $0x58] sm:$0xff]
        %v455 = vld [vmem:[%s439 + $0x60] sm:$0xff]
        %v456 = vld [vmem:[%s439 + $0x68] sm:$0xff]
        %v457 = vld [vmem:[%s439 + $0x70] sm:$0xff]
        %v458 = vld [vmem:[%s439 + $0x78] sm:$0xff]
        %v459 = vld [vmem:[%s439 + $0x80] sm:$0xff]
        %v460 = vld [vmem:[%s439 + $0x88] sm:$0xff]
        %v461 = vld [vmem:[%s439 + $0x90] sm:$0xff]
        %v462 = vld [vmem:[%s439 + $0x98] sm:$0xff]
        %v463 = vld [vmem:[%s439 + $0xa0] sm:$0xff]
        %v464 = vld [vmem:[%s439 + $0xa8] sm:$0xff]
        %v465 = vld [vmem:[%s439 + $0xb0] sm:$0xff]
        %v466 = vld [vmem:[%s439 + $0xb8] sm:$0xff]
        %v467 = vld [vmem:[%s439 + $0xc0] sm:$0xff]
        %v468 = vld [vmem:[%s439 + $0xc8] sm:$0xff]
        %v469 = vld [vmem:[%s439 + $0xd0] sm:$0xff]
        %v470 = vld [vmem:[%s439 + $0xd8] sm:$0xff]
        %v471 = vld [vmem:[%s439 + $0xe0] sm:$0xff]
        %v472 = vld [vmem:[%s439 + $0xe8] sm:$0xff]
        %v473 = vld [vmem:[%s439 + $0xf0] sm:$0xff]
        %v474 = vld [vmem:[%s439 + $0xf8] sm:$0xff]
        %v475 = vpack.c.bf16 %v444, %v443
        %v476 = vpack.c.bf16 %v446, %v445
        %v477 = vpack.c.bf16 %v448, %v447
        %v478 = vpack.c.bf16 %v450, %v449
        %v479 = vpack.c.bf16 %v452, %v451
        %v480 = vpack.c.bf16 %v454, %v453
        %v481 = vpack.c.bf16 %v456, %v455
        %v482 = vpack.c.bf16 %v458, %v457
        %v483 = vpack.c.bf16 %v460, %v459
        %v484 = vpack.c.bf16 %v462, %v461
        %v485 = vpack.c.bf16 %v464, %v463
        %v486 = vpack.c.bf16 %v466, %v465
        %v487 = vpack.c.bf16 %v468, %v467
        %v488 = vpack.c.bf16 %v470, %v469
        %v489 = vpack.c.bf16 %v472, %v471
        %v490 = vpack.c.bf16 %v474, %v473
        %v491 = vld [vmem:[%s1] sm:$0xf]
        %v492 = vld [vmem:[%s2] sm:$0x1]
        %v494 = vlaneseq
        %v495 = vshrl.u32 %v494, 7
        %v496 = vsub.s32 0, %v495
        %v497 = vrot.slane %v492, %v496
        %vm499 = vcmask 64512
        %v501 = vsel %vm499, %v475, 0
        %v504 = vsel %vm499, %v476, 0
        %v507 = vsel %vm499, %v477, 0
        %v510 = vsel %vm499, %v478, 0
        %v513 = vsel %vm499, %v479, 0
        %v516 = vsel %vm499, %v480, 0
        %v519 = vsel %vm499, %v481, 0
        %v522 = vsel %vm499, %v482, 0
        %v525 = vsel %vm499, %v483, 0
        %v528 = vsel %vm499, %v484, 0
        %v531 = vsel %vm499, %v485, 0
        %v534 = vsel %vm499, %v486, 0
        %v537 = vsel %vm499, %v487, 0
        %v540 = vsel %vm499, %v488, 0
        %v543 = vsel %vm499, %v489, 0
        %v546 = vsel %vm499, %v490, 0
        %vm548 = vcmask 1043456
        %v550 = vsel %vm548, %v491, 0
        %552 = vmatprep.subr.bf16.mxu0 0
        %553 = vmatpush1.bf16.msra.mxu0 0
        %554 = vmatprep.subr.bf16.mxu0 0
        %555 = vmatpush1.bf16.msra.mxu0 0
        %556 = vmatprep.subr.bf16.mxu0 0
        %557 = vmatpush1.bf16.msra.mxu0 0
        %558 = vmatprep.subr.bf16.mxu0 0
        %559 = vmatpush1.bf16.msra.mxu0 0
        %560 = vmatprep.subr.bf16.mxu0 0
        %561 = vmatpush1.bf16.msra.mxu0 0
        %562 = vmatprep.subr.bf16.mxu0 0
        %563 = vmatpush1.bf16.msra.mxu0 0
        %564 = vmatprep.subr.bf16.mxu0 0
        %565 = vmatpush1.bf16.msra.mxu0 0
        %566 = vmatprep.subr.bf16.mxu0 0
        %567 = vmatpush1.bf16.msra.mxu0 %v550
        %568 = vmatprep.subr.bf16.mxu0 0
        %569 = vmatpush2.bf16.msra.mxu0 0
        %570 = vmatprep.subr.bf16.mxu0 0
        %571 = vmatpush2.bf16.msra.mxu0 0
        %572 = vmatprep.subr.bf16.mxu0 0
        %573 = vmatpush2.bf16.msra.mxu0 0
        %574 = vmatprep.subr.bf16.mxu0 0
        %575 = vmatpush2.bf16.msra.mxu0 0
        %576 = vmatprep.subr.bf16.mxu0 0
        %577 = vmatpush2.bf16.msra.mxu0 0
        %578 = vmatprep.subr.bf16.mxu0 0
        %579 = vmatpush2.bf16.msra.mxu0 0
        %580 = vmatprep.subr.bf16.mxu0 0
        %581 = vmatpush2.bf16.msra.mxu0 0
        %582 = vmatprep.subr.bf16.mxu0 0
        %583 = vmatpush2.bf16.msra.mxu0 0
        %584 = vmatprep.mubr.bf16.mxu0 0
        %585 = vmatmul.mubr.bf16.gmra.mxu0 %v501
        %v586 = vpop.f32.mrf.mxu0
        %v587 = vadd.f32 %v497, %v586
        %v588 = vpop.f32.mrf.mxu0
        %v589 = vpop.f32.mrf.mxu0
        %v590 = vadd.f32 %v497, %v589
        %v591 = vpop.f32.mrf.mxu0
        %592 = vmatprep.mubr.bf16.mxu0 0
        %593 = vmatmul.mubr.bf16.gmra.mxu0 %v504
        %v594 = vpop.f32.mrf.mxu0
        %v595 = vadd.f32 %v497, %v594
        %v596 = vpop.f32.mrf.mxu0
        %v597 = vpop.f32.mrf.mxu0
        %v598 = vadd.f32 %v497, %v597
        %v599 = vpop.f32.mrf.mxu0
        %600 = vmatprep.mubr.bf16.mxu0 0
        %601 = vmatmul.mubr.bf16.gmra.mxu0 %v507
        %v602 = vpop.f32.mrf.mxu0
        %v603 = vadd.f32 %v497, %v602
        %v604 = vpop.f32.mrf.mxu0
        %v605 = vpop.f32.mrf.mxu0
        %v606 = vadd.f32 %v497, %v605
        %v607 = vpop.f32.mrf.mxu0
        %608 = vmatprep.mubr.bf16.mxu0 0
        %609 = vmatmul.mubr.bf16.gmra.mxu0 %v510
        %v610 = vpop.f32.mrf.mxu0
        %v611 = vadd.f32 %v497, %v610
        %v612 = vpop.f32.mrf.mxu0
        %v613 = vpop.f32.mrf.mxu0
        %v614 = vadd.f32 %v497, %v613
        %v615 = vpop.f32.mrf.mxu0
        %616 = vmatprep.mubr.bf16.mxu0 0
        %617 = vmatmul.mubr.bf16.gmra.mxu0 %v513
        %v618 = vpop.f32.mrf.mxu0
        %v619 = vadd.f32 %v497, %v618
        %v620 = vpop.f32.mrf.mxu0
        %v621 = vpop.f32.mrf.mxu0
        %v622 = vadd.f32 %v497, %v621
        %v623 = vpop.f32.mrf.mxu0
        %624 = vmatprep.mubr.bf16.mxu0 0
        %625 = vmatmul.mubr.bf16.gmra.mxu0 %v516
        %v626 = vpop.f32.mrf.mxu0
        %v627 = vadd.f32 %v497, %v626
        %v628 = vpop.f32.mrf.mxu0
        %v629 = vpop.f32.mrf.mxu0
        %v630 = vadd.f32 %v497, %v629
        %v631 = vpop.f32.mrf.mxu0
        %632 = vmatprep.mubr.bf16.mxu0 0
        %633 = vmatmul.mubr.bf16.gmra.mxu0 %v519
        %v634 = vpop.f32.mrf.mxu0
        %v635 = vadd.f32 %v497, %v634
        %v636 = vpop.f32.mrf.mxu0
        %v637 = vpop.f32.mrf.mxu0
        %v638 = vadd.f32 %v497, %v637
        %v639 = vpop.f32.mrf.mxu0
        %640 = vmatprep.mubr.bf16.mxu0 0
        %641 = vmatmul.mubr.bf16.gmra.mxu0 %v522
        %v642 = vpop.f32.mrf.mxu0
        %v643 = vadd.f32 %v497, %v642
        %v644 = vpop.f32.mrf.mxu0
        %v645 = vpop.f32.mrf.mxu0
        %v646 = vadd.f32 %v497, %v645
        %v647 = vpop.f32.mrf.mxu0
        %648 = vmatprep.mubr.bf16.mxu0 0
        %649 = vmatmul.mubr.bf16.gmra.mxu0 %v525
        %v650 = vpop.f32.mrf.mxu0
        %v651 = vadd.f32 %v497, %v650
        %v652 = vpop.f32.mrf.mxu0
        %v653 = vpop.f32.mrf.mxu0
        %v654 = vadd.f32 %v497, %v653
        %v655 = vpop.f32.mrf.mxu0
        %656 = vmatprep.mubr.bf16.mxu0 0
        %657 = vmatmul.mubr.bf16.gmra.mxu0 %v528
        %v658 = vpop.f32.mrf.mxu0
        %v659 = vadd.f32 %v497, %v658
        %v660 = vpop.f32.mrf.mxu0
        %v661 = vpop.f32.mrf.mxu0
        %v662 = vadd.f32 %v497, %v661
        %v663 = vpop.f32.mrf.mxu0
        %664 = vmatprep.mubr.bf16.mxu0 0
        %665 = vmatmul.mubr.bf16.gmra.mxu0 %v531
        %v666 = vpop.f32.mrf.mxu0
        %v667 = vadd.f32 %v497, %v666
        %v668 = vpop.f32.mrf.mxu0
        %v669 = vpop.f32.mrf.mxu0
        %v670 = vadd.f32 %v497, %v669
        %v671 = vpop.f32.mrf.mxu0
        %672 = vmatprep.mubr.bf16.mxu0 0
        %673 = vmatmul.mubr.bf16.gmra.mxu0 %v534
        %v674 = vpop.f32.mrf.mxu0
        %v675 = vadd.f32 %v497, %v674
        %v676 = vpop.f32.mrf.mxu0
        %v677 = vpop.f32.mrf.mxu0
        %v678 = vadd.f32 %v497, %v677
        %v679 = vpop.f32.mrf.mxu0
        %680 = vmatprep.mubr.bf16.mxu0 0
        %681 = vmatmul.mubr.bf16.gmra.mxu0 %v537
        %v682 = vpop.f32.mrf.mxu0
        %v683 = vadd.f32 %v497, %v682
        %v684 = vpop.f32.mrf.mxu0
        %v685 = vpop.f32.mrf.mxu0
        %v686 = vadd.f32 %v497, %v685
        %v687 = vpop.f32.mrf.mxu0
        %688 = vmatprep.mubr.bf16.mxu0 0
        %689 = vmatmul.mubr.bf16.gmra.mxu0 %v540
        %v690 = vpop.f32.mrf.mxu0
        %v691 = vadd.f32 %v497, %v690
        %v692 = vpop.f32.mrf.mxu0
        %v693 = vpop.f32.mrf.mxu0
        %v694 = vadd.f32 %v497, %v693
        %v695 = vpop.f32.mrf.mxu0
        %696 = vmatprep.mubr.bf16.mxu0 0
        %697 = vmatmul.mubr.bf16.gmra.mxu0 %v543
        %v698 = vpop.f32.mrf.mxu0
        %v699 = vadd.f32 %v497, %v698
        %v700 = vpop.f32.mrf.mxu0
        %v701 = vpop.f32.mrf.mxu0
        %v702 = vadd.f32 %v497, %v701
        %v703 = vpop.f32.mrf.mxu0
        %704 = vmatprep.mubr.bf16.mxu0 0
        %705 = vmatmul.mubr.bf16.gmra.mxu0 %v546
        %v706 = vpop.f32.mrf.mxu0
        %v707 = vadd.f32 %v497, %v706
        %v708 = vpop.f32.mrf.mxu0
        %v709 = vpop.f32.mrf.mxu0
        %v710 = vadd.f32 %v497, %v709
        %v711 = vpop.f32.mrf.mxu0
        %712 = vdwg.mxu0
        %v713 = vmul.f32 %v587, 0.5
        %v714 = vmul.f32 %v590, 0.5
        %v715 = vmul.f32 %v595, 0.5
        %v716 = vmul.f32 %v598, 0.5
        %v717 = vmul.f32 %v603, 0.5
        %v718 = vmul.f32 %v606, 0.5
        %v719 = vmul.f32 %v611, 0.5
        %v720 = vmul.f32 %v614, 0.5
        %v721 = vmul.f32 %v619, 0.5
        %v722 = vmul.f32 %v622, 0.5
        %v723 = vmul.f32 %v627, 0.5
        %v724 = vmul.f32 %v630, 0.5
        %v725 = vmul.f32 %v635, 0.5
        %v726 = vmul.f32 %v638, 0.5
        %v727 = vmul.f32 %v643, 0.5
        %v728 = vmul.f32 %v646, 0.5
        %v729 = vmul.f32 %v651, 0.5
        %v730 = vmul.f32 %v654, 0.5
        %v731 = vmul.f32 %v659, 0.5
        %v732 = vmul.f32 %v662, 0.5
        %v733 = vmul.f32 %v667, 0.5
        %v734 = vmul.f32 %v670, 0.5
        %v735 = vmul.f32 %v675, 0.5
        %v736 = vmul.f32 %v678, 0.5
        %v737 = vmul.f32 %v683, 0.5
        %v738 = vmul.f32 %v686, 0.5
        %v739 = vmul.f32 %v691, 0.5
        %v740 = vmul.f32 %v694, 0.5
        %v741 = vmul.f32 %v699, 0.5
        %v742 = vmul.f32 %v702, 0.5
        %v743 = vmul.f32 %v707, 0.5
        %v744 = vmul.f32 %v710, 0.5
        %v745 = vmul.f32 %v587, 0.70710677
        %v746 = vmul.f32 %v590, 0.70710677
        %v747 = vmul.f32 %v595, 0.70710677
        %v748 = vmul.f32 %v598, 0.70710677
        %v749 = vmul.f32 %v603, 0.70710677
        %v750 = vmul.f32 %v606, 0.70710677
        %v751 = vmul.f32 %v611, 0.70710677
        %v752 = vmul.f32 %v614, 0.70710677
        %v753 = vmul.f32 %v619, 0.70710677
        %v754 = vmul.f32 %v622, 0.70710677
        %v755 = vmul.f32 %v627, 0.70710677
        %v756 = vmul.f32 %v630, 0.70710677
        %v757 = vmul.f32 %v635, 0.70710677
        %v758 = vmul.f32 %v638, 0.70710677
        %v759 = vmul.f32 %v643, 0.70710677
        %v760 = vmul.f32 %v646, 0.70710677
        %v761 = vmul.f32 %v651, 0.70710677
        %v762 = vmul.f32 %v654, 0.70710677
        %v763 = vmul.f32 %v659, 0.70710677
        %v764 = vmul.f32 %v662, 0.70710677
        %v765 = vmul.f32 %v667, 0.70710677
        %v766 = vmul.f32 %v670, 0.70710677
        %v767 = vmul.f32 %v675, 0.70710677
        %v768 = vmul.f32 %v678, 0.70710677
        %v769 = vmul.f32 %v683, 0.70710677
        %v770 = vmul.f32 %v686, 0.70710677
        %v771 = vmul.f32 %v691, 0.70710677
        %v772 = vmul.f32 %v694, 0.70710677
        %v773 = vmul.f32 %v699, 0.70710677
        %v774 = vmul.f32 %v702, 0.70710677
        %v775 = vmul.f32 %v707, 0.70710677
        %v776 = vmul.f32 %v710, 0.70710677
        %v777 = verf.f32.pop %v745
        %v778 = verf.f32.pop %v746
        %v779 = verf.f32.pop %v747
        %v780 = verf.f32.pop %v748
        %v781 = verf.f32.pop %v749
        %v782 = verf.f32.pop %v750
        %v783 = verf.f32.pop %v751
        %v784 = verf.f32.pop %v752
        %v785 = verf.f32.pop %v753
        %v786 = verf.f32.pop %v754
        %v787 = verf.f32.pop %v755
        %v788 = verf.f32.pop %v756
        %v789 = verf.f32.pop %v757
        %v790 = verf.f32.pop %v758
        %v791 = verf.f32.pop %v759
        %v792 = verf.f32.pop %v760
        %v793 = verf.f32.pop %v761
        %v794 = verf.f32.pop %v762
        %v795 = verf.f32.pop %v763
        %v796 = verf.f32.pop %v764
        %v797 = verf.f32.pop %v765
        %v798 = verf.f32.pop %v766
        %v799 = verf.f32.pop %v767
        %v800 = verf.f32.pop %v768
        %v801 = verf.f32.pop %v769
        %v802 = verf.f32.pop %v770
        %v803 = verf.f32.pop %v771
        %v804 = verf.f32.pop %v772
        %v805 = verf.f32.pop %v773
        %v806 = verf.f32.pop %v774
        %v807 = verf.f32.pop %v775
        %v808 = verf.f32.pop %v776
        %v809 = vadd.f32 %v777, 1.0
        %v810 = vadd.f32 %v778, 1.0
        %v811 = vadd.f32 %v779, 1.0
        %v812 = vadd.f32 %v780, 1.0
        %v813 = vadd.f32 %v781, 1.0
        %v814 = vadd.f32 %v782, 1.0
        %v815 = vadd.f32 %v783, 1.0
        %v816 = vadd.f32 %v784, 1.0
        %v817 = vadd.f32 %v785, 1.0
        %v818 = vadd.f32 %v786, 1.0
        %v819 = vadd.f32 %v787, 1.0
        %v820 = vadd.f32 %v788, 1.0
        %v821 = vadd.f32 %v789, 1.0
        %v822 = vadd.f32 %v790, 1.0
        %v823 = vadd.f32 %v791, 1.0
        %v824 = vadd.f32 %v792, 1.0
        %v825 = vadd.f32 %v793, 1.0
        %v826 = vadd.f32 %v794, 1.0
        %v827 = vadd.f32 %v795, 1.0
        %v828 = vadd.f32 %v796, 1.0
        %v829 = vadd.f32 %v797, 1.0
        %v830 = vadd.f32 %v798, 1.0
        %v831 = vadd.f32 %v799, 1.0
        %v832 = vadd.f32 %v800, 1.0
        %v833 = vadd.f32 %v801, 1.0
        %v834 = vadd.f32 %v802, 1.0
        %v835 = vadd.f32 %v803, 1.0
        %v836 = vadd.f32 %v804, 1.0
        %v837 = vadd.f32 %v805, 1.0
        %v838 = vadd.f32 %v806, 1.0
        %v839 = vadd.f32 %v807, 1.0
        %v840 = vadd.f32 %v808, 1.0
        %v841 = vmul.f32 %v713, %v809
        %v842 = vmul.f32 %v714, %v810
        %v843 = vmul.f32 %v715, %v811
        %v844 = vmul.f32 %v716, %v812
        %v845 = vmul.f32 %v717, %v813
        %v846 = vmul.f32 %v718, %v814
        %v847 = vmul.f32 %v719, %v815
        %v848 = vmul.f32 %v720, %v816
        %v849 = vmul.f32 %v721, %v817
        %v850 = vmul.f32 %v722, %v818
        %v851 = vmul.f32 %v723, %v819
        %v852 = vmul.f32 %v724, %v820
        %v853 = vmul.f32 %v725, %v821
        %v854 = vmul.f32 %v726, %v822
        %v855 = vmul.f32 %v727, %v823
        %v856 = vmul.f32 %v728, %v824
        %v857 = vmul.f32 %v729, %v825
        %v858 = vmul.f32 %v730, %v826
        %v859 = vmul.f32 %v731, %v827
        %v860 = vmul.f32 %v732, %v828
        %v861 = vmul.f32 %v733, %v829
        %v862 = vmul.f32 %v734, %v830
        %v863 = vmul.f32 %v735, %v831
        %v864 = vmul.f32 %v736, %v832
        %v865 = vmul.f32 %v737, %v833
        %v866 = vmul.f32 %v738, %v834
        %v867 = vmul.f32 %v739, %v835
        %v868 = vmul.f32 %v740, %v836
        %v869 = vmul.f32 %v741, %v837
        %v870 = vmul.f32 %v742, %v838
        %v871 = vmul.f32 %v743, %v839
        %v872 = vmul.f32 %v744, %v840
        %v873 = vpack.c.bf16 %v842, %v841
        %v874 = vpack.c.bf16 %v844, %v843
        %v875 = vpack.c.bf16 %v846, %v845
        %v876 = vpack.c.bf16 %v848, %v847
        %v877 = vpack.c.bf16 %v850, %v849
        %v878 = vpack.c.bf16 %v852, %v851
        %v879 = vpack.c.bf16 %v854, %v853
        %v880 = vpack.c.bf16 %v856, %v855
        %v881 = vpack.c.bf16 %v858, %v857
        %v882 = vpack.c.bf16 %v860, %v859
        %v883 = vpack.c.bf16 %v862, %v861
        %v884 = vpack.c.bf16 %v864, %v863
        %v885 = vpack.c.bf16 %v866, %v865
        %v886 = vpack.c.bf16 %v868, %v867
        %v887 = vpack.c.bf16 %v870, %v869
        %v888 = vpack.c.bf16 %v872, %v871
        %v889 = vld [vmem:[%s3] sm:$0xf]
        %v890 = vld [vmem:[%s3 + $0x4] sm:$0xf]
        %v891 = vld [vmem:[%s3 + $0x8] sm:$0xf]
        %v892 = vld [vmem:[%s3 + $0xc] sm:$0xf]
        %v893 = vld [vmem:[%s3 + $0x10] sm:$0xf]
        %v894 = vld [vmem:[%s3 + $0x14] sm:$0xf]
        %v895 = vld [vmem:[%s3 + $0x18] sm:$0xf]
        %v896 = vld [vmem:[%s3 + $0x1c] sm:$0xf]
        %v897 = vld [vmem:[%s4] sm:$0x1]
        %v899 = vlaneseq
        %v900 = vshrl.u32 %v899, 7
        %v901 = vsub.s32 0, %v900
        %v902 = vrot.slane %v897, %v901
        %v912 = vunpack.c.l.b16 %v889
        %v913 = vunpack.c.l.b16 %v890
        %v914 = vunpack.c.l.b16 %v891
        %v915 = vunpack.c.l.b16 %v892
        %v916 = vunpack.c.l.b16 %v893
        %v917 = vunpack.c.l.b16 %v894
        %v918 = vunpack.c.l.b16 %v895
        %v919 = vunpack.c.l.b16 %v896
        %v920 = vpack.c.b16 %v913, %v912
        %v921 = vpack.c.b16 %v915, %v914
        %v922 = vpack.c.b16 %v917, %v916
        %v923 = vpack.c.b16 %v919, %v918
        %vm928 = vcmask 523264
        %v930 = vsel %vm928, %v873, 0
        %v933 = vsel %vm928, %v874, 0
        %v936 = vsel %vm928, %v875, 0
        %v939 = vsel %vm928, %v876, 0
        %v942 = vsel %vm928, %v877, 0
        %v945 = vsel %vm928, %v878, 0
        %v948 = vsel %vm928, %v879, 0
        %v951 = vsel %vm928, %v880, 0
        %v954 = vsel %vm928, %v881, 0
        %v957 = vsel %vm928, %v882, 0
        %v960 = vsel %vm928, %v883, 0
        %v963 = vsel %vm928, %v884, 0
        %v966 = vsel %vm928, %v885, 0
        %v969 = vsel %vm928, %v886, 0
        %v972 = vsel %vm928, %v887, 0
        %v975 = vsel %vm928, %v888, 0
        %977 = vmatprep.subr.bf16.mxu0 0
        %978 = vmatpush1.bf16.msra.mxu0 0
        %979 = vmatprep.subr.bf16.mxu0 0
        %980 = vmatpush1.bf16.msra.mxu0 0
        %981 = vmatprep.subr.bf16.mxu0 0
        %982 = vmatpush1.bf16.msra.mxu0 0
        %983 = vmatprep.subr.bf16.mxu0 0
        %984 = vmatpush1.bf16.msra.mxu0 0
        %985 = vmatprep.subr.bf16.mxu0 0
        %986 = vmatpush1.bf16.msra.mxu0 %v923
        %987 = vmatprep.subr.bf16.mxu0 0
        %988 = vmatpush1.bf16.msra.mxu0 %v922
        %989 = vmatprep.subr.bf16.mxu0 0
        %990 = vmatpush1.bf16.msra.mxu0 %v921
        %991 = vmatprep.subr.bf16.mxu0 0
        %992 = vmatpush1.bf16.msra.mxu0 %v920
        %993 = vmatprep.subr.bf16.mxu0 0
        %994 = vmatpush2.bf16.msra.mxu0 0
        %995 = vmatprep.subr.bf16.mxu0 0
        %996 = vmatpush2.bf16.msra.mxu0 0
        %997 = vmatprep.subr.bf16.mxu0 0
        %998 = vmatpush2.bf16.msra.mxu0 0
        %999 = vmatprep.subr.bf16.mxu0 0
        %1000 = vmatpush2.bf16.msra.mxu0 0
        %1001 = vmatprep.subr.bf16.mxu0 0
        %1002 = vmatpush2.bf16.msra.mxu0 0
        %1003 = vmatprep.subr.bf16.mxu0 0
        %1004 = vmatpush2.bf16.msra.mxu0 0
        %1005 = vmatprep.subr.bf16.mxu0 0
        %1006 = vmatpush2.bf16.msra.mxu0 0
        %1007 = vmatprep.subr.bf16.mxu0 0
        %1008 = vmatpush2.bf16.msra.mxu0 0
        %1009 = vmatprep.mubr.bf16.mxu0 0
        %1010 = vmatmul.mubr.bf16.gmra.mxu0 %v930
        %v1011 = vpop.f32.mrf.mxu0
        %v1012 = vadd.f32 %v902, %v1011
        %v1013 = vpop.f32.mrf.mxu0
        %v1014 = vpop.f32.mrf.mxu0
        %v1015 = vadd.f32 %v902, %v1014
        %v1016 = vpop.f32.mrf.mxu0
        %1017 = vmatprep.mubr.bf16.mxu0 0
        %1018 = vmatmul.mubr.bf16.gmra.mxu0 %v933
        %v1019 = vpop.f32.mrf.mxu0
        %v1020 = vadd.f32 %v902, %v1019
        %v1021 = vpop.f32.mrf.mxu0
        %v1022 = vpop.f32.mrf.mxu0
        %v1023 = vadd.f32 %v902, %v1022
        %v1024 = vpop.f32.mrf.mxu0
        %1025 = vmatprep.mubr.bf16.mxu0 0
        %1026 = vmatmul.mubr.bf16.gmra.mxu0 %v936
        %v1027 = vpop.f32.mrf.mxu0
        %v1028 = vadd.f32 %v902, %v1027
        %v1029 = vpop.f32.mrf.mxu0
        %v1030 = vpop.f32.mrf.mxu0
        %v1031 = vadd.f32 %v902, %v1030
        %v1032 = vpop.f32.mrf.mxu0
        %1033 = vmatprep.mubr.bf16.mxu0 0
        %1034 = vmatmul.mubr.bf16.gmra.mxu0 %v939
        %v1035 = vpop.f32.mrf.mxu0
        %v1036 = vadd.f32 %v902, %v1035
        %v1037 = vpop.f32.mrf.mxu0
        %v1038 = vpop.f32.mrf.mxu0
        %v1039 = vadd.f32 %v902, %v1038
        %v1040 = vpop.f32.mrf.mxu0
        %1041 = vmatprep.mubr.bf16.mxu0 0
        %1042 = vmatmul.mubr.bf16.gmra.mxu0 %v942
        %v1043 = vpop.f32.mrf.mxu0
        %v1044 = vadd.f32 %v902, %v1043
        %v1045 = vpop.f32.mrf.mxu0
        %v1046 = vpop.f32.mrf.mxu0
        %v1047 = vadd.f32 %v902, %v1046
        %v1048 = vpop.f32.mrf.mxu0
        %1049 = vmatprep.mubr.bf16.mxu0 0
        %1050 = vmatmul.mubr.bf16.gmra.mxu0 %v945
        %v1051 = vpop.f32.mrf.mxu0
        %v1052 = vadd.f32 %v902, %v1051
        %v1053 = vpop.f32.mrf.mxu0
        %v1054 = vpop.f32.mrf.mxu0
        %v1055 = vadd.f32 %v902, %v1054
        %v1056 = vpop.f32.mrf.mxu0
        %1057 = vmatprep.mubr.bf16.mxu0 0
        %1058 = vmatmul.mubr.bf16.gmra.mxu0 %v948
        %v1059 = vpop.f32.mrf.mxu0
        %v1060 = vadd.f32 %v902, %v1059
        %v1061 = vpop.f32.mrf.mxu0
        %v1062 = vpop.f32.mrf.mxu0
        %v1063 = vadd.f32 %v902, %v1062
        %v1064 = vpop.f32.mrf.mxu0
        %1065 = vmatprep.mubr.bf16.mxu0 0
        %1066 = vmatmul.mubr.bf16.gmra.mxu0 %v951
        %v1067 = vpop.f32.mrf.mxu0
        %v1068 = vadd.f32 %v902, %v1067
        %v1069 = vpop.f32.mrf.mxu0
        %v1070 = vpop.f32.mrf.mxu0
        %v1071 = vadd.f32 %v902, %v1070
        %v1072 = vpop.f32.mrf.mxu0
        %1073 = vmatprep.mubr.bf16.mxu0 0
        %1074 = vmatmul.mubr.bf16.gmra.mxu0 %v954
        %v1075 = vpop.f32.mrf.mxu0
        %v1076 = vadd.f32 %v902, %v1075
        %v1077 = vpop.f32.mrf.mxu0
        %v1078 = vpop.f32.mrf.mxu0
        %v1079 = vadd.f32 %v902, %v1078
        %v1080 = vpop.f32.mrf.mxu0
        %1081 = vmatprep.mubr.bf16.mxu0 0
        %1082 = vmatmul.mubr.bf16.gmra.mxu0 %v957
        %v1083 = vpop.f32.mrf.mxu0
        %v1084 = vadd.f32 %v902, %v1083
        %v1085 = vpop.f32.mrf.mxu0
        %v1086 = vpop.f32.mrf.mxu0
        %v1087 = vadd.f32 %v902, %v1086
        %v1088 = vpop.f32.mrf.mxu0
        %1089 = vmatprep.mubr.bf16.mxu0 0
        %1090 = vmatmul.mubr.bf16.gmra.mxu0 %v960
        %v1091 = vpop.f32.mrf.mxu0
        %v1092 = vadd.f32 %v902, %v1091
        %v1093 = vpop.f32.mrf.mxu0
        %v1094 = vpop.f32.mrf.mxu0
        %v1095 = vadd.f32 %v902, %v1094
        %v1096 = vpop.f32.mrf.mxu0
        %1097 = vmatprep.mubr.bf16.mxu0 0
        %1098 = vmatmul.mubr.bf16.gmra.mxu0 %v963
        %v1099 = vpop.f32.mrf.mxu0
        %v1100 = vadd.f32 %v902, %v1099
        %v1101 = vpop.f32.mrf.mxu0
        %v1102 = vpop.f32.mrf.mxu0
        %v1103 = vadd.f32 %v902, %v1102
        %v1104 = vpop.f32.mrf.mxu0
        %1105 = vmatprep.mubr.bf16.mxu0 0
        %1106 = vmatmul.mubr.bf16.gmra.mxu0 %v966
        %v1107 = vpop.f32.mrf.mxu0
        %v1108 = vadd.f32 %v902, %v1107
        %v1109 = vpop.f32.mrf.mxu0
        %v1110 = vpop.f32.mrf.mxu0
        %v1111 = vadd.f32 %v902, %v1110
        %v1112 = vpop.f32.mrf.mxu0
        %1113 = vmatprep.mubr.bf16.mxu0 0
        %1114 = vmatmul.mubr.bf16.gmra.mxu0 %v969
        %v1115 = vpop.f32.mrf.mxu0
        %v1116 = vadd.f32 %v902, %v1115
        %v1117 = vpop.f32.mrf.mxu0
        %v1118 = vpop.f32.mrf.mxu0
        %v1119 = vadd.f32 %v902, %v1118
        %v1120 = vpop.f32.mrf.mxu0
        %1121 = vmatprep.mubr.bf16.mxu0 0
        %1122 = vmatmul.mubr.bf16.gmra.mxu0 %v972
        %v1123 = vpop.f32.mrf.mxu0
        %v1124 = vadd.f32 %v902, %v1123
        %v1125 = vpop.f32.mrf.mxu0
        %v1126 = vpop.f32.mrf.mxu0
        %v1127 = vadd.f32 %v902, %v1126
        %v1128 = vpop.f32.mrf.mxu0
        %1129 = vmatprep.mubr.bf16.mxu0 0
        %1130 = vmatmul.mubr.bf16.gmra.mxu0 %v975
        %v1131 = vpop.f32.mrf.mxu0
        %v1132 = vadd.f32 %v902, %v1131
        %v1133 = vpop.f32.mrf.mxu0
        %v1134 = vpop.f32.mrf.mxu0
        %v1135 = vadd.f32 %v902, %v1134
        %v1136 = vpop.f32.mrf.mxu0
        %1137 = vdwg.mxu0
        %v1138 = vmul.f32 %v1012, 0.5
        %v1139 = vmul.f32 %v1015, 0.5
        %v1140 = vmul.f32 %v1020, 0.5
        %v1141 = vmul.f32 %v1023, 0.5
        %v1142 = vmul.f32 %v1028, 0.5
        %v1143 = vmul.f32 %v1031, 0.5
        %v1144 = vmul.f32 %v1036, 0.5
        %v1145 = vmul.f32 %v1039, 0.5
        %v1146 = vmul.f32 %v1044, 0.5
        %v1147 = vmul.f32 %v1047, 0.5
        %v1148 = vmul.f32 %v1052, 0.5
        %v1149 = vmul.f32 %v1055, 0.5
        %v1150 = vmul.f32 %v1060, 0.5
        %v1151 = vmul.f32 %v1063, 0.5
        %v1152 = vmul.f32 %v1068, 0.5
        %v1153 = vmul.f32 %v1071, 0.5
        %v1154 = vmul.f32 %v1076, 0.5
        %v1155 = vmul.f32 %v1079, 0.5
        %v1156 = vmul.f32 %v1084, 0.5
        %v1157 = vmul.f32 %v1087, 0.5
        %v1158 = vmul.f32 %v1092, 0.5
        %v1159 = vmul.f32 %v1095, 0.5
        %v1160 = vmul.f32 %v1100, 0.5
        %v1161 = vmul.f32 %v1103, 0.5
        %v1162 = vmul.f32 %v1108, 0.5
        %v1163 = vmul.f32 %v1111, 0.5
        %v1164 = vmul.f32 %v1116, 0.5
        %v1165 = vmul.f32 %v1119, 0.5
        %v1166 = vmul.f32 %v1124, 0.5
        %v1167 = vmul.f32 %v1127, 0.5
        %v1168 = vmul.f32 %v1132, 0.5
        %v1169 = vmul.f32 %v1135, 0.5
        %v1170 = vmul.f32 %v1012, 0.70710677
        %v1171 = vmul.f32 %v1015, 0.70710677
        %v1172 = vmul.f32 %v1020, 0.70710677
        %v1173 = vmul.f32 %v1023, 0.70710677
        %v1174 = vmul.f32 %v1028, 0.70710677
        %v1175 = vmul.f32 %v1031, 0.70710677
        %v1176 = vmul.f32 %v1036, 0.70710677
        %v1177 = vmul.f32 %v1039, 0.70710677
        %v1178 = vmul.f32 %v1044, 0.70710677
        %v1179 = vmul.f32 %v1047, 0.70710677
        %v1180 = vmul.f32 %v1052, 0.70710677
        %v1181 = vmul.f32 %v1055, 0.70710677
        %v1182 = vmul.f32 %v1060, 0.70710677
        %v1183 = vmul.f32 %v1063, 0.70710677
        %v1184 = vmul.f32 %v1068, 0.70710677
        %v1185 = vmul.f32 %v1071, 0.70710677
        %v1186 = vmul.f32 %v1076, 0.70710677
        %v1187 = vmul.f32 %v1079, 0.70710677
        %v1188 = vmul.f32 %v1084, 0.70710677
        %v1189 = vmul.f32 %v1087, 0.70710677
        %v1190 = vmul.f32 %v1092, 0.70710677
        %v1191 = vmul.f32 %v1095, 0.70710677
        %v1192 = vmul.f32 %v1100, 0.70710677
        %v1193 = vmul.f32 %v1103, 0.70710677
        %v1194 = vmul.f32 %v1108, 0.70710677
        %v1195 = vmul.f32 %v1111, 0.70710677
        %v1196 = vmul.f32 %v1116, 0.70710677
        %v1197 = vmul.f32 %v1119, 0.70710677
        %v1198 = vmul.f32 %v1124, 0.70710677
        %v1199 = vmul.f32 %v1127, 0.70710677
        %v1200 = vmul.f32 %v1132, 0.70710677
        %v1201 = vmul.f32 %v1135, 0.70710677
        %v1202 = verf.f32.pop %v1170
        %v1203 = verf.f32.pop %v1171
        %v1204 = verf.f32.pop %v1172
        %v1205 = verf.f32.pop %v1173
        %v1206 = verf.f32.pop %v1174
        %v1207 = verf.f32.pop %v1175
        %v1208 = verf.f32.pop %v1176
        %v1209 = verf.f32.pop %v1177
        %v1210 = verf.f32.pop %v1178
        %v1211 = verf.f32.pop %v1179
        %v1212 = verf.f32.pop %v1180
        %v1213 = verf.f32.pop %v1181
        %v1214 = verf.f32.pop %v1182
        %v1215 = verf.f32.pop %v1183
        %v1216 = verf.f32.pop %v1184
        %v1217 = verf.f32.pop %v1185
        %v1218 = verf.f32.pop %v1186
        %v1219 = verf.f32.pop %v1187
        %v1220 = verf.f32.pop %v1188
        %v1221 = verf.f32.pop %v1189
        %v1222 = verf.f32.pop %v1190
        %v1223 = verf.f32.pop %v1191
        %v1224 = verf.f32.pop %v1192
        %v1225 = verf.f32.pop %v1193
        %v1226 = verf.f32.pop %v1194
        %v1227 = verf.f32.pop %v1195
        %v1228 = verf.f32.pop %v1196
        %v1229 = verf.f32.pop %v1197
        %v1230 = verf.f32.pop %v1198
        %v1231 = verf.f32.pop %v1199
        %v1232 = verf.f32.pop %v1200
        %v1233 = verf.f32.pop %v1201
        %v1234 = vadd.f32 %v1202, 1.0
        %v1235 = vadd.f32 %v1203, 1.0
        %v1236 = vadd.f32 %v1204, 1.0
        %v1237 = vadd.f32 %v1205, 1.0
        %v1238 = vadd.f32 %v1206, 1.0
        %v1239 = vadd.f32 %v1207, 1.0
        %v1240 = vadd.f32 %v1208, 1.0
        %v1241 = vadd.f32 %v1209, 1.0
        %v1242 = vadd.f32 %v1210, 1.0
        %v1243 = vadd.f32 %v1211, 1.0
        %v1244 = vadd.f32 %v1212, 1.0
        %v1245 = vadd.f32 %v1213, 1.0
        %v1246 = vadd.f32 %v1214, 1.0
        %v1247 = vadd.f32 %v1215, 1.0
        %v1248 = vadd.f32 %v1216, 1.0
        %v1249 = vadd.f32 %v1217, 1.0
        %v1250 = vadd.f32 %v1218, 1.0
        %v1251 = vadd.f32 %v1219, 1.0
        %v1252 = vadd.f32 %v1220, 1.0
        %v1253 = vadd.f32 %v1221, 1.0
        %v1254 = vadd.f32 %v1222, 1.0
        %v1255 = vadd.f32 %v1223, 1.0
        %v1256 = vadd.f32 %v1224, 1.0
        %v1257 = vadd.f32 %v1225, 1.0
        %v1258 = vadd.f32 %v1226, 1.0
        %v1259 = vadd.f32 %v1227, 1.0
        %v1260 = vadd.f32 %v1228, 1.0
        %v1261 = vadd.f32 %v1229, 1.0
        %v1262 = vadd.f32 %v1230, 1.0
        %v1263 = vadd.f32 %v1231, 1.0
        %v1264 = vadd.f32 %v1232, 1.0
        %v1265 = vadd.f32 %v1233, 1.0
        %v1266 = vmul.f32 %v1138, %v1234
        %v1267 = vmul.f32 %v1139, %v1235
        %v1268 = vmul.f32 %v1140, %v1236
        %v1269 = vmul.f32 %v1141, %v1237
        %v1270 = vmul.f32 %v1142, %v1238
        %v1271 = vmul.f32 %v1143, %v1239
        %v1272 = vmul.f32 %v1144, %v1240
        %v1273 = vmul.f32 %v1145, %v1241
        %v1274 = vmul.f32 %v1146, %v1242
        %v1275 = vmul.f32 %v1147, %v1243
        %v1276 = vmul.f32 %v1148, %v1244
        %v1277 = vmul.f32 %v1149, %v1245
        %v1278 = vmul.f32 %v1150, %v1246
        %v1279 = vmul.f32 %v1151, %v1247
        %v1280 = vmul.f32 %v1152, %v1248
        %v1281 = vmul.f32 %v1153, %v1249
        %v1282 = vmul.f32 %v1154, %v1250
        %v1283 = vmul.f32 %v1155, %v1251
        %v1284 = vmul.f32 %v1156, %v1252
        %v1285 = vmul.f32 %v1157, %v1253
        %v1286 = vmul.f32 %v1158, %v1254
        %v1287 = vmul.f32 %v1159, %v1255
        %v1288 = vmul.f32 %v1160, %v1256
        %v1289 = vmul.f32 %v1161, %v1257
        %v1290 = vmul.f32 %v1162, %v1258
        %v1291 = vmul.f32 %v1163, %v1259
        %v1292 = vmul.f32 %v1164, %v1260
        %v1293 = vmul.f32 %v1165, %v1261
        %v1294 = vmul.f32 %v1166, %v1262
        %v1295 = vmul.f32 %v1167, %v1263
        %v1296 = vmul.f32 %v1168, %v1264
        %v1297 = vmul.f32 %v1169, %v1265
        %v1298 = vpack.c.bf16 %v1267, %v1266
        %v1299 = vpack.c.bf16 %v1269, %v1268
        %v1300 = vpack.c.bf16 %v1271, %v1270
        %v1301 = vpack.c.bf16 %v1273, %v1272
        %v1302 = vpack.c.bf16 %v1275, %v1274
        %v1303 = vpack.c.bf16 %v1277, %v1276
        %v1304 = vpack.c.bf16 %v1279, %v1278
        %v1305 = vpack.c.bf16 %v1281, %v1280
        %v1306 = vpack.c.bf16 %v1283, %v1282
        %v1307 = vpack.c.bf16 %v1285, %v1284
        %v1308 = vpack.c.bf16 %v1287, %v1286
        %v1309 = vpack.c.bf16 %v1289, %v1288
        %v1310 = vpack.c.bf16 %v1291, %v1290
        %v1311 = vpack.c.bf16 %v1293, %v1292
        %v1312 = vpack.c.bf16 %v1295, %v1294
        %v1313 = vpack.c.bf16 %v1297, %v1296
        %v1314 = vld [vmem:[%s5] sm:$0xf]
        %v1315 = vld [vmem:[%s5 + $0x4] sm:$0xf]
        %v1316 = vld [vmem:[%s5 + $0x8] sm:$0xf]
        %v1317 = vld [vmem:[%s5 + $0xc] sm:$0xf]
        %v1318 = vld [vmem:[%s5 + $0x10] sm:$0xf]
        %v1319 = vld [vmem:[%s5 + $0x14] sm:$0xf]
        %v1320 = vld [vmem:[%s5 + $0x18] sm:$0xf]
        %v1321 = vld [vmem:[%s5 + $0x1c] sm:$0xf]
        %v1322 = vld [vmem:[%s5 + $0x20] sm:$0xf]
        %v1323 = vld [vmem:[%s5 + $0x24] sm:$0xf]
        %v1324 = vld [vmem:[%s5 + $0x28] sm:$0xf]
        %v1325 = vld [vmem:[%s5 + $0x2c] sm:$0xf]
        %v1326 = vld [vmem:[%s5 + $0x30] sm:$0xf]
        %v1327 = vld [vmem:[%s5 + $0x34] sm:$0xf]
        %v1328 = vld [vmem:[%s5 + $0x38] sm:$0xf]
        %v1329 = vld [vmem:[%s5 + $0x3c] sm:$0xf]
        %v1330 = vld [vmem:[%s6] sm:$0x1]
        %v1332 = vlaneseq
        %v1333 = vshrl.u32 %v1332, 7
        %v1334 = vsub.s32 0, %v1333
        %v1335 = vrot.slane %v1330, %v1334
        %v1353 = vunpack.c.l.b16 %v1314
        %v1354 = vunpack.c.l.b16 %v1315
        %v1355 = vunpack.c.l.b16 %v1316
        %v1356 = vunpack.c.l.b16 %v1317
        %v1357 = vunpack.c.l.b16 %v1318
        %v1358 = vunpack.c.l.b16 %v1319
        %v1359 = vunpack.c.l.b16 %v1320
        %v1360 = vunpack.c.l.b16 %v1321
        %v1361 = vunpack.c.l.b16 %v1322
        %v1362 = vunpack.c.l.b16 %v1323
        %v1363 = vunpack.c.l.b16 %v1324
        %v1364 = vunpack.c.l.b16 %v1325
        %v1365 = vunpack.c.l.b16 %v1326
        %v1366 = vunpack.c.l.b16 %v1327
        %v1367 = vunpack.c.l.b16 %v1328
        %v1368 = vunpack.c.l.b16 %v1329
        %v1369 = vpack.c.b16 %v1354, %v1353
        %v1370 = vpack.c.b16 %v1356, %v1355
        %v1371 = vpack.c.b16 %v1358, %v1357
        %v1372 = vpack.c.b16 %v1360, %v1359
        %v1373 = vpack.c.b16 %v1362, %v1361
        %v1374 = vpack.c.b16 %v1364, %v1363
        %v1375 = vpack.c.b16 %v1366, %v1365
        %v1376 = vpack.c.b16 %v1368, %v1367
        %1385 = vmatprep.subr.bf16.mxu0 0
        %1386 = vmatpush1.bf16.msra.mxu0 %v1376
        %1387 = vmatprep.subr.bf16.mxu0 0
        %1388 = vmatpush1.bf16.msra.mxu0 %v1375
        %1389 = vmatprep.subr.bf16.mxu0 0
        %1390 = vmatpush1.bf16.msra.mxu0 %v1374
        %1391 = vmatprep.subr.bf16.mxu0 0
        %1392 = vmatpush1.bf16.msra.mxu0 %v1373
        %1393 = vmatprep.subr.bf16.mxu0 0
        %1394 = vmatpush1.bf16.msra.mxu0 %v1372
        %1395 = vmatprep.subr.bf16.mxu0 0
        %1396 = vmatpush1.bf16.msra.mxu0 %v1371
        %1397 = vmatprep.subr.bf16.mxu0 0
        %1398 = vmatpush1.bf16.msra.mxu0 %v1370
        %1399 = vmatprep.subr.bf16.mxu0 0
        %1400 = vmatpush1.bf16.msra.mxu0 %v1369
        %1401 = vmatprep.subr.bf16.mxu0 0
        %1402 = vmatpush2.bf16.msra.mxu0 0
        %1403 = vmatprep.subr.bf16.mxu0 0
        %1404 = vmatpush2.bf16.msra.mxu0 0
        %1405 = vmatprep.subr.bf16.mxu0 0
        %1406 = vmatpush2.bf16.msra.mxu0 0
        %1407 = vmatprep.subr.bf16.mxu0 0
        %1408 = vmatpush2.bf16.msra.mxu0 0
        %1409 = vmatprep.subr.bf16.mxu0 0
        %1410 = vmatpush2.bf16.msra.mxu0 0
        %1411 = vmatprep.subr.bf16.mxu0 0
        %1412 = vmatpush2.bf16.msra.mxu0 0
        %1413 = vmatprep.subr.bf16.mxu0 0
        %1414 = vmatpush2.bf16.msra.mxu0 0
        %1415 = vmatprep.subr.bf16.mxu0 0
        %1416 = vmatpush2.bf16.msra.mxu0 0
        %1417 = vmatprep.mubr.bf16.mxu0 0
        %1418 = vmatmul.mubr.bf16.gmra.mxu0 %v1298
        %v1419 = vpop.f32.mrf.mxu0
        %v1420 = vadd.f32 %v1335, %v1419
        %v1421 = vpop.f32.mrf.mxu0
        %v1422 = vpop.f32.mrf.mxu0
        %v1423 = vadd.f32 %v1335, %v1422
        %v1424 = vpop.f32.mrf.mxu0
        %1425 = vmatprep.mubr.bf16.mxu0 0
        %1426 = vmatmul.mubr.bf16.gmra.mxu0 %v1299
        %v1427 = vpop.f32.mrf.mxu0
        %v1428 = vadd.f32 %v1335, %v1427
        %v1429 = vpop.f32.mrf.mxu0
        %v1430 = vpop.f32.mrf.mxu0
        %v1431 = vadd.f32 %v1335, %v1430
        %v1432 = vpop.f32.mrf.mxu0
        %1433 = vmatprep.mubr.bf16.mxu0 0
        %1434 = vmatmul.mubr.bf16.gmra.mxu0 %v1300
        %v1435 = vpop.f32.mrf.mxu0
        %v1436 = vadd.f32 %v1335, %v1435
        %v1437 = vpop.f32.mrf.mxu0
        %v1438 = vpop.f32.mrf.mxu0
        %v1439 = vadd.f32 %v1335, %v1438
        %v1440 = vpop.f32.mrf.mxu0
        %1441 = vmatprep.mubr.bf16.mxu0 0
        %1442 = vmatmul.mubr.bf16.gmra.mxu0 %v1301
        %v1443 = vpop.f32.mrf.mxu0
        %v1444 = vadd.f32 %v1335, %v1443
        %v1445 = vpop.f32.mrf.mxu0
        %v1446 = vpop.f32.mrf.mxu0
        %v1447 = vadd.f32 %v1335, %v1446
        %v1448 = vpop.f32.mrf.mxu0
        %1449 = vmatprep.mubr.bf16.mxu0 0
        %1450 = vmatmul.mubr.bf16.gmra.mxu0 %v1302
        %v1451 = vpop.f32.mrf.mxu0
        %v1452 = vadd.f32 %v1335, %v1451
        %v1453 = vpop.f32.mrf.mxu0
        %v1454 = vpop.f32.mrf.mxu0
        %v1455 = vadd.f32 %v1335, %v1454
        %v1456 = vpop.f32.mrf.mxu0
        %1457 = vmatprep.mubr.bf16.mxu0 0
        %1458 = vmatmul.mubr.bf16.gmra.mxu0 %v1303
        %v1459 = vpop.f32.mrf.mxu0
        %v1460 = vadd.f32 %v1335, %v1459
        %v1461 = vpop.f32.mrf.mxu0
        %v1462 = vpop.f32.mrf.mxu0
        %v1463 = vadd.f32 %v1335, %v1462
        %v1464 = vpop.f32.mrf.mxu0
        %1465 = vmatprep.mubr.bf16.mxu0 0
        %1466 = vmatmul.mubr.bf16.gmra.mxu0 %v1304
        %v1467 = vpop.f32.mrf.mxu0
        %v1468 = vadd.f32 %v1335, %v1467
        %v1469 = vpop.f32.mrf.mxu0
        %v1470 = vpop.f32.mrf.mxu0
        %v1471 = vadd.f32 %v1335, %v1470
        %v1472 = vpop.f32.mrf.mxu0
        %1473 = vmatprep.mubr.bf16.mxu0 0
        %1474 = vmatmul.mubr.bf16.gmra.mxu0 %v1305
        %v1475 = vpop.f32.mrf.mxu0
        %v1476 = vadd.f32 %v1335, %v1475
        %v1477 = vpop.f32.mrf.mxu0
        %v1478 = vpop.f32.mrf.mxu0
        %v1479 = vadd.f32 %v1335, %v1478
        %v1480 = vpop.f32.mrf.mxu0
        %1481 = vmatprep.mubr.bf16.mxu0 0
        %1482 = vmatmul.mubr.bf16.gmra.mxu0 %v1306
        %v1483 = vpop.f32.mrf.mxu0
        %v1484 = vadd.f32 %v1335, %v1483
        %v1485 = vpop.f32.mrf.mxu0
        %v1486 = vpop.f32.mrf.mxu0
        %v1487 = vadd.f32 %v1335, %v1486
        %v1488 = vpop.f32.mrf.mxu0
        %1489 = vmatprep.mubr.bf16.mxu0 0
        %1490 = vmatmul.mubr.bf16.gmra.mxu0 %v1307
        %v1491 = vpop.f32.mrf.mxu0
        %v1492 = vadd.f32 %v1335, %v1491
        %v1493 = vpop.f32.mrf.mxu0
        %v1494 = vpop.f32.mrf.mxu0
        %v1495 = vadd.f32 %v1335, %v1494
        %v1496 = vpop.f32.mrf.mxu0
        %1497 = vmatprep.mubr.bf16.mxu0 0
        %1498 = vmatmul.mubr.bf16.gmra.mxu0 %v1308
        %v1499 = vpop.f32.mrf.mxu0
        %v1500 = vadd.f32 %v1335, %v1499
        %v1501 = vpop.f32.mrf.mxu0
        %v1502 = vpop.f32.mrf.mxu0
        %v1503 = vadd.f32 %v1335, %v1502
        %v1504 = vpop.f32.mrf.mxu0
        %1505 = vmatprep.mubr.bf16.mxu0 0
        %1506 = vmatmul.mubr.bf16.gmra.mxu0 %v1309
        %v1507 = vpop.f32.mrf.mxu0
        %v1508 = vadd.f32 %v1335, %v1507
        %v1509 = vpop.f32.mrf.mxu0
        %v1510 = vpop.f32.mrf.mxu0
        %v1511 = vadd.f32 %v1335, %v1510
        %v1512 = vpop.f32.mrf.mxu0
        %1513 = vmatprep.mubr.bf16.mxu0 0
        %1514 = vmatmul.mubr.bf16.gmra.mxu0 %v1310
        %v1515 = vpop.f32.mrf.mxu0
        %v1516 = vadd.f32 %v1335, %v1515
        %v1517 = vpop.f32.mrf.mxu0
        %v1518 = vpop.f32.mrf.mxu0
        %v1519 = vadd.f32 %v1335, %v1518
        %v1520 = vpop.f32.mrf.mxu0
        %1521 = vmatprep.mubr.bf16.mxu0 0
        %1522 = vmatmul.mubr.bf16.gmra.mxu0 %v1311
        %v1523 = vpop.f32.mrf.mxu0
        %v1524 = vadd.f32 %v1335, %v1523
        %v1525 = vpop.f32.mrf.mxu0
        %v1526 = vpop.f32.mrf.mxu0
        %v1527 = vadd.f32 %v1335, %v1526
        %v1528 = vpop.f32.mrf.mxu0
        %1529 = vmatprep.mubr.bf16.mxu0 0
        %1530 = vmatmul.mubr.bf16.gmra.mxu0 %v1312
        %v1531 = vpop.f32.mrf.mxu0
        %v1532 = vadd.f32 %v1335, %v1531
        %v1533 = vpop.f32.mrf.mxu0
        %v1534 = vpop.f32.mrf.mxu0
        %v1535 = vadd.f32 %v1335, %v1534
        %v1536 = vpop.f32.mrf.mxu0
        %1537 = vmatprep.mubr.bf16.mxu0 0
        %1538 = vmatmul.mubr.bf16.gmra.mxu0 %v1313
        %v1539 = vpop.f32.mrf.mxu0
        %v1540 = vadd.f32 %v1335, %v1539
        %v1541 = vpop.f32.mrf.mxu0
        %v1542 = vpop.f32.mrf.mxu0
        %v1543 = vadd.f32 %v1335, %v1542
        %v1544 = vpop.f32.mrf.mxu0
        %1545 = vdwg.mxu0
        %v1546 = vmul.f32 %v1420, 0.5
        %v1547 = vmul.f32 %v1423, 0.5
        %v1548 = vmul.f32 %v1428, 0.5
        %v1549 = vmul.f32 %v1431, 0.5
        %v1550 = vmul.f32 %v1436, 0.5
        %v1551 = vmul.f32 %v1439, 0.5
        %v1552 = vmul.f32 %v1444, 0.5
        %v1553 = vmul.f32 %v1447, 0.5
        %v1554 = vmul.f32 %v1452, 0.5
        %v1555 = vmul.f32 %v1455, 0.5
        %v1556 = vmul.f32 %v1460, 0.5
        %v1557 = vmul.f32 %v1463, 0.5
        %v1558 = vmul.f32 %v1468, 0.5
        %v1559 = vmul.f32 %v1471, 0.5
        %v1560 = vmul.f32 %v1476, 0.5
        %v1561 = vmul.f32 %v1479, 0.5
        %v1562 = vmul.f32 %v1484, 0.5
        %v1563 = vmul.f32 %v1487, 0.5
        %v1564 = vmul.f32 %v1492, 0.5
        %v1565 = vmul.f32 %v1495, 0.5
        %v1566 = vmul.f32 %v1500, 0.5
        %v1567 = vmul.f32 %v1503, 0.5
        %v1568 = vmul.f32 %v1508, 0.5
        %v1569 = vmul.f32 %v1511, 0.5
        %v1570 = vmul.f32 %v1516, 0.5
        %v1571 = vmul.f32 %v1519, 0.5
        %v1572 = vmul.f32 %v1524, 0.5
        %v1573 = vmul.f32 %v1527, 0.5
        %v1574 = vmul.f32 %v1532, 0.5
        %v1575 = vmul.f32 %v1535, 0.5
        %v1576 = vmul.f32 %v1540, 0.5
        %v1577 = vmul.f32 %v1543, 0.5
        %v1578 = vmul.f32 %v1420, 0.70710677
        %v1579 = vmul.f32 %v1423, 0.70710677
        %v1580 = vmul.f32 %v1428, 0.70710677
        %v1581 = vmul.f32 %v1431, 0.70710677
        %v1582 = vmul.f32 %v1436, 0.70710677
        %v1583 = vmul.f32 %v1439, 0.70710677
        %v1584 = vmul.f32 %v1444, 0.70710677
        %v1585 = vmul.f32 %v1447, 0.70710677
        %v1586 = vmul.f32 %v1452, 0.70710677
        %v1587 = vmul.f32 %v1455, 0.70710677
        %v1588 = vmul.f32 %v1460, 0.70710677
        %v1589 = vmul.f32 %v1463, 0.70710677
        %v1590 = vmul.f32 %v1468, 0.70710677
        %v1591 = vmul.f32 %v1471, 0.70710677
        %v1592 = vmul.f32 %v1476, 0.70710677
        %v1593 = vmul.f32 %v1479, 0.70710677
        %v1594 = vmul.f32 %v1484, 0.70710677
        %v1595 = vmul.f32 %v1487, 0.70710677
        %v1596 = vmul.f32 %v1492, 0.70710677
        %v1597 = vmul.f32 %v1495, 0.70710677
        %v1598 = vmul.f32 %v1500, 0.70710677
        %v1599 = vmul.f32 %v1503, 0.70710677
        %v1600 = vmul.f32 %v1508, 0.70710677
        %v1601 = vmul.f32 %v1511, 0.70710677
        %v1602 = vmul.f32 %v1516, 0.70710677
        %v1603 = vmul.f32 %v1519, 0.70710677
        %v1604 = vmul.f32 %v1524, 0.70710677
        %v1605 = vmul.f32 %v1527, 0.70710677
        %v1606 = vmul.f32 %v1532, 0.70710677
        %v1607 = vmul.f32 %v1535, 0.70710677
        %v1608 = vmul.f32 %v1540, 0.70710677
        %v1609 = vmul.f32 %v1543, 0.70710677
        %v1610 = verf.f32.pop %v1578
        %v1611 = verf.f32.pop %v1579
        %v1612 = verf.f32.pop %v1580
        %v1613 = verf.f32.pop %v1581
        %v1614 = verf.f32.pop %v1582
        %v1615 = verf.f32.pop %v1583
        %v1616 = verf.f32.pop %v1584
        %v1617 = verf.f32.pop %v1585
        %v1618 = verf.f32.pop %v1586
        %v1619 = verf.f32.pop %v1587
        %v1620 = verf.f32.pop %v1588
        %v1621 = verf.f32.pop %v1589
        %v1622 = verf.f32.pop %v1590
        %v1623 = verf.f32.pop %v1591
        %v1624 = verf.f32.pop %v1592
        %v1625 = verf.f32.pop %v1593
        %v1626 = verf.f32.pop %v1594
        %v1627 = verf.f32.pop %v1595
        %v1628 = verf.f32.pop %v1596
        %v1629 = verf.f32.pop %v1597
        %v1630 = verf.f32.pop %v1598
        %v1631 = verf.f32.pop %v1599
        %v1632 = verf.f32.pop %v1600
        %v1633 = verf.f32.pop %v1601
        %v1634 = verf.f32.pop %v1602
        %v1635 = verf.f32.pop %v1603
        %v1636 = verf.f32.pop %v1604
        %v1637 = verf.f32.pop %v1605
        %v1638 = verf.f32.pop %v1606
        %v1639 = verf.f32.pop %v1607
        %v1640 = verf.f32.pop %v1608
        %v1641 = verf.f32.pop %v1609
        %v1642 = vadd.f32 %v1610, 1.0
        %v1643 = vadd.f32 %v1611, 1.0
        %v1644 = vadd.f32 %v1612, 1.0
        %v1645 = vadd.f32 %v1613, 1.0
        %v1646 = vadd.f32 %v1614, 1.0
        %v1647 = vadd.f32 %v1615, 1.0
        %v1648 = vadd.f32 %v1616, 1.0
        %v1649 = vadd.f32 %v1617, 1.0
        %v1650 = vadd.f32 %v1618, 1.0
        %v1651 = vadd.f32 %v1619, 1.0
        %v1652 = vadd.f32 %v1620, 1.0
        %v1653 = vadd.f32 %v1621, 1.0
        %v1654 = vadd.f32 %v1622, 1.0
        %v1655 = vadd.f32 %v1623, 1.0
        %v1656 = vadd.f32 %v1624, 1.0
        %v1657 = vadd.f32 %v1625, 1.0
        %v1658 = vadd.f32 %v1626, 1.0
        %v1659 = vadd.f32 %v1627, 1.0
        %v1660 = vadd.f32 %v1628, 1.0
        %v1661 = vadd.f32 %v1629, 1.0
        %v1662 = vadd.f32 %v1630, 1.0
        %v1663 = vadd.f32 %v1631, 1.0
        %v1664 = vadd.f32 %v1632, 1.0
        %v1665 = vadd.f32 %v1633, 1.0
        %v1666 = vadd.f32 %v1634, 1.0
        %v1667 = vadd.f32 %v1635, 1.0
        %v1668 = vadd.f32 %v1636, 1.0
        %v1669 = vadd.f32 %v1637, 1.0
        %v1670 = vadd.f32 %v1638, 1.0
        %v1671 = vadd.f32 %v1639, 1.0
        %v1672 = vadd.f32 %v1640, 1.0
        %v1673 = vadd.f32 %v1641, 1.0
        %v1674 = vmul.f32 %v1546, %v1642
        %v1675 = vmul.f32 %v1547, %v1643
        %v1676 = vmul.f32 %v1548, %v1644
        %v1677 = vmul.f32 %v1549, %v1645
        %v1678 = vmul.f32 %v1550, %v1646
        %v1679 = vmul.f32 %v1551, %v1647
        %v1680 = vmul.f32 %v1552, %v1648
        %v1681 = vmul.f32 %v1553, %v1649
        %v1682 = vmul.f32 %v1554, %v1650
        %v1683 = vmul.f32 %v1555, %v1651
        %v1684 = vmul.f32 %v1556, %v1652
        %v1685 = vmul.f32 %v1557, %v1653
        %v1686 = vmul.f32 %v1558, %v1654
        %v1687 = vmul.f32 %v1559, %v1655
        %v1688 = vmul.f32 %v1560, %v1656
        %v1689 = vmul.f32 %v1561, %v1657
        %v1690 = vmul.f32 %v1562, %v1658
        %v1691 = vmul.f32 %v1563, %v1659
        %v1692 = vmul.f32 %v1564, %v1660
        %v1693 = vmul.f32 %v1565, %v1661
        %v1694 = vmul.f32 %v1566, %v1662
        %v1695 = vmul.f32 %v1567, %v1663
        %v1696 = vmul.f32 %v1568, %v1664
        %v1697 = vmul.f32 %v1569, %v1665
        %v1698 = vmul.f32 %v1570, %v1666
        %v1699 = vmul.f32 %v1571, %v1667
        %v1700 = vmul.f32 %v1572, %v1668
        %v1701 = vmul.f32 %v1573, %v1669
        %v1702 = vmul.f32 %v1574, %v1670
        %v1703 = vmul.f32 %v1575, %v1671
        %v1704 = vmul.f32 %v1576, %v1672
        %v1705 = vmul.f32 %v1577, %v1673
        %v1706 = vpack.c.bf16 %v1675, %v1674
        %v1707 = vpack.c.bf16 %v1677, %v1676
        %v1708 = vpack.c.bf16 %v1679, %v1678
        %v1709 = vpack.c.bf16 %v1681, %v1680
        %v1710 = vpack.c.bf16 %v1683, %v1682
        %v1711 = vpack.c.bf16 %v1685, %v1684
        %v1712 = vpack.c.bf16 %v1687, %v1686
        %v1713 = vpack.c.bf16 %v1689, %v1688
        %v1714 = vpack.c.bf16 %v1691, %v1690
        %v1715 = vpack.c.bf16 %v1693, %v1692
        %v1716 = vpack.c.bf16 %v1695, %v1694
        %v1717 = vpack.c.bf16 %v1697, %v1696
        %v1718 = vpack.c.bf16 %v1699, %v1698
        %v1719 = vpack.c.bf16 %v1701, %v1700
        %v1720 = vpack.c.bf16 %v1703, %v1702
        %v1721 = vpack.c.bf16 %v1705, %v1704
        %v1722 = vld [vmem:[%s7] sm:$0xf]
        %v1723 = vld [vmem:[%s7 + $0x4] sm:$0xf]
        %v1724 = vld [vmem:[%s7 + $0x8] sm:$0xf]
        %v1725 = vld [vmem:[%s7 + $0xc] sm:$0xf]
        %v1726 = vld [vmem:[%s7 + $0x10] sm:$0xf]
        %v1727 = vld [vmem:[%s7 + $0x14] sm:$0xf]
        %v1728 = vld [vmem:[%s7 + $0x18] sm:$0xf]
        %v1729 = vld [vmem:[%s7 + $0x1c] sm:$0xf]
        %v1730 = vld [vmem:[%s7 + $0x20] sm:$0xf]
        %v1731 = vld [vmem:[%s7 + $0x24] sm:$0xf]
        %v1732 = vld [vmem:[%s7 + $0x28] sm:$0xf]
        %v1733 = vld [vmem:[%s7 + $0x2c] sm:$0xf]
        %v1734 = vld [vmem:[%s7 + $0x30] sm:$0xf]
        %v1735 = vld [vmem:[%s7 + $0x34] sm:$0xf]
        %v1736 = vld [vmem:[%s7 + $0x38] sm:$0xf]
        %v1737 = vld [vmem:[%s7 + $0x3c] sm:$0xf]
        %v1738 = vld [vmem:[%s8] sm:$0x1]
        %v1740 = vlaneseq
        %v1741 = vshrl.u32 %v1740, 7
        %v1742 = vsub.s32 0, %v1741
        %v1743 = vrot.slane %v1738, %v1742
        %v1761 = vunpack.c.l.b16 %v1722
        %v1762 = vunpack.c.l.b16 %v1723
        %v1763 = vunpack.c.l.b16 %v1724
        %v1764 = vunpack.c.l.b16 %v1725
        %v1765 = vunpack.c.l.b16 %v1726
        %v1766 = vunpack.c.l.b16 %v1727
        %v1767 = vunpack.c.l.b16 %v1728
        %v1768 = vunpack.c.l.b16 %v1729
        %v1769 = vunpack.c.l.b16 %v1730
        %v1770 = vunpack.c.l.b16 %v1731
        %v1771 = vunpack.c.l.b16 %v1732
        %v1772 = vunpack.c.l.b16 %v1733
        %v1773 = vunpack.c.l.b16 %v1734
        %v1774 = vunpack.c.l.b16 %v1735
        %v1775 = vunpack.c.l.b16 %v1736
        %v1776 = vunpack.c.l.b16 %v1737
        %v1777 = vpack.c.b16 %v1762, %v1761
        %v1778 = vpack.c.b16 %v1764, %v1763
        %v1779 = vpack.c.b16 %v1766, %v1765
        %v1780 = vpack.c.b16 %v1768, %v1767
        %v1781 = vpack.c.b16 %v1770, %v1769
        %v1782 = vpack.c.b16 %v1772, %v1771
        %v1783 = vpack.c.b16 %v1774, %v1773
        %v1784 = vpack.c.b16 %v1776, %v1775
        %1793 = vmatprep.subr.bf16.mxu0 0
        %1794 = vmatpush1.bf16.msra.mxu0 %v1784
        %1795 = vmatprep.subr.bf16.mxu0 0
        %1796 = vmatpush1.bf16.msra.mxu0 %v1783
        %1797 = vmatprep.subr.bf16.mxu0 0
        %1798 = vmatpush1.bf16.msra.mxu0 %v1782
        %1799 = vmatprep.subr.bf16.mxu0 0
        %1800 = vmatpush1.bf16.msra.mxu0 %v1781
        %1801 = vmatprep.subr.bf16.mxu0 0
        %1802 = vmatpush1.bf16.msra.mxu0 %v1780
        %1803 = vmatprep.subr.bf16.mxu0 0
        %1804 = vmatpush1.bf16.msra.mxu0 %v1779
        %1805 = vmatprep.subr.bf16.mxu0 0
        %1806 = vmatpush1.bf16.msra.mxu0 %v1778
        %1807 = vmatprep.subr.bf16.mxu0 0
        %1808 = vmatpush1.bf16.msra.mxu0 %v1777
        %1809 = vmatprep.subr.bf16.mxu0 0
        %1810 = vmatpush2.bf16.msra.mxu0 0
        %1811 = vmatprep.subr.bf16.mxu0 0
        %1812 = vmatpush2.bf16.msra.mxu0 0
        %1813 = vmatprep.subr.bf16.mxu0 0
        %1814 = vmatpush2.bf16.msra.mxu0 0
        %1815 = vmatprep.subr.bf16.mxu0 0
        %1816 = vmatpush2.bf16.msra.mxu0 0
        %1817 = vmatprep.subr.bf16.mxu0 0
        %1818 = vmatpush2.bf16.msra.mxu0 0
        %1819 = vmatprep.subr.bf16.mxu0 0
        %1820 = vmatpush2.bf16.msra.mxu0 0
        %1821 = vmatprep.subr.bf16.mxu0 0
        %1822 = vmatpush2.bf16.msra.mxu0 0
        %1823 = vmatprep.subr.bf16.mxu0 0
        %1824 = vmatpush2.bf16.msra.mxu0 0
        %1825 = vmatprep.mubr.bf16.mxu0 0
        %1826 = vmatmul.mubr.bf16.gmra.mxu0 %v1706
        %v1827 = vpop.f32.mrf.mxu0
        %v1828 = vadd.f32 %v1743, %v1827
        %v1829 = vpop.f32.mrf.mxu0
        %v1830 = vpop.f32.mrf.mxu0
        %v1831 = vadd.f32 %v1743, %v1830
        %v1832 = vpop.f32.mrf.mxu0
        %1833 = vmatprep.mubr.bf16.mxu0 0
        %1834 = vmatmul.mubr.bf16.gmra.mxu0 %v1707
        %v1835 = vpop.f32.mrf.mxu0
        %v1836 = vadd.f32 %v1743, %v1835
        %v1837 = vpop.f32.mrf.mxu0
        %v1838 = vpop.f32.mrf.mxu0
        %v1839 = vadd.f32 %v1743, %v1838
        %v1840 = vpop.f32.mrf.mxu0
        %1841 = vmatprep.mubr.bf16.mxu0 0
        %1842 = vmatmul.mubr.bf16.gmra.mxu0 %v1708
        %v1843 = vpop.f32.mrf.mxu0
        %v1844 = vadd.f32 %v1743, %v1843
        %v1845 = vpop.f32.mrf.mxu0
        %v1846 = vpop.f32.mrf.mxu0
        %v1847 = vadd.f32 %v1743, %v1846
        %v1848 = vpop.f32.mrf.mxu0
        %1849 = vmatprep.mubr.bf16.mxu0 0
        %1850 = vmatmul.mubr.bf16.gmra.mxu0 %v1709
        %v1851 = vpop.f32.mrf.mxu0
        %v1852 = vadd.f32 %v1743, %v1851
        %v1853 = vpop.f32.mrf.mxu0
        %v1854 = vpop.f32.mrf.mxu0
        %v1855 = vadd.f32 %v1743, %v1854
        %v1856 = vpop.f32.mrf.mxu0
        %1857 = vmatprep.mubr.bf16.mxu0 0
        %1858 = vmatmul.mubr.bf16.gmra.mxu0 %v1710
        %v1859 = vpop.f32.mrf.mxu0
        %v1860 = vadd.f32 %v1743, %v1859
        %v1861 = vpop.f32.mrf.mxu0
        %v1862 = vpop.f32.mrf.mxu0
        %v1863 = vadd.f32 %v1743, %v1862
        %v1864 = vpop.f32.mrf.mxu0
        %1865 = vmatprep.mubr.bf16.mxu0 0
        %1866 = vmatmul.mubr.bf16.gmra.mxu0 %v1711
        %v1867 = vpop.f32.mrf.mxu0
        %v1868 = vadd.f32 %v1743, %v1867
        %v1869 = vpop.f32.mrf.mxu0
        %v1870 = vpop.f32.mrf.mxu0
        %v1871 = vadd.f32 %v1743, %v1870
        %v1872 = vpop.f32.mrf.mxu0
        %1873 = vmatprep.mubr.bf16.mxu0 0
        %1874 = vmatmul.mubr.bf16.gmra.mxu0 %v1712
        %v1875 = vpop.f32.mrf.mxu0
        %v1876 = vadd.f32 %v1743, %v1875
        %v1877 = vpop.f32.mrf.mxu0
        %v1878 = vpop.f32.mrf.mxu0
        %v1879 = vadd.f32 %v1743, %v1878
        %v1880 = vpop.f32.mrf.mxu0
        %1881 = vmatprep.mubr.bf16.mxu0 0
        %1882 = vmatmul.mubr.bf16.gmra.mxu0 %v1713
        %v1883 = vpop.f32.mrf.mxu0
        %v1884 = vadd.f32 %v1743, %v1883
        %v1885 = vpop.f32.mrf.mxu0
        %v1886 = vpop.f32.mrf.mxu0
        %v1887 = vadd.f32 %v1743, %v1886
        %v1888 = vpop.f32.mrf.mxu0
        %1889 = vmatprep.mubr.bf16.mxu0 0
        %1890 = vmatmul.mubr.bf16.gmra.mxu0 %v1714
        %v1891 = vpop.f32.mrf.mxu0
        %v1892 = vadd.f32 %v1743, %v1891
        %v1893 = vpop.f32.mrf.mxu0
        %v1894 = vpop.f32.mrf.mxu0
        %v1895 = vadd.f32 %v1743, %v1894
        %v1896 = vpop.f32.mrf.mxu0
        %1897 = vmatprep.mubr.bf16.mxu0 0
        %1898 = vmatmul.mubr.bf16.gmra.mxu0 %v1715
        %v1899 = vpop.f32.mrf.mxu0
        %v1900 = vadd.f32 %v1743, %v1899
        %v1901 = vpop.f32.mrf.mxu0
        %v1902 = vpop.f32.mrf.mxu0
        %v1903 = vadd.f32 %v1743, %v1902
        %v1904 = vpop.f32.mrf.mxu0
        %1905 = vmatprep.mubr.bf16.mxu0 0
        %1906 = vmatmul.mubr.bf16.gmra.mxu0 %v1716
        %v1907 = vpop.f32.mrf.mxu0
        %v1908 = vadd.f32 %v1743, %v1907
        %v1909 = vpop.f32.mrf.mxu0
        %v1910 = vpop.f32.mrf.mxu0
        %v1911 = vadd.f32 %v1743, %v1910
        %v1912 = vpop.f32.mrf.mxu0
        %1913 = vmatprep.mubr.bf16.mxu0 0
        %1914 = vmatmul.mubr.bf16.gmra.mxu0 %v1717
        %v1915 = vpop.f32.mrf.mxu0
        %v1916 = vadd.f32 %v1743, %v1915
        %v1917 = vpop.f32.mrf.mxu0
        %v1918 = vpop.f32.mrf.mxu0
        %v1919 = vadd.f32 %v1743, %v1918
        %v1920 = vpop.f32.mrf.mxu0
        %1921 = vmatprep.mubr.bf16.mxu0 0
        %1922 = vmatmul.mubr.bf16.gmra.mxu0 %v1718
        %v1923 = vpop.f32.mrf.mxu0
        %v1924 = vadd.f32 %v1743, %v1923
        %v1925 = vpop.f32.mrf.mxu0
        %v1926 = vpop.f32.mrf.mxu0
        %v1927 = vadd.f32 %v1743, %v1926
        %v1928 = vpop.f32.mrf.mxu0
        %1929 = vmatprep.mubr.bf16.mxu0 0
        %1930 = vmatmul.mubr.bf16.gmra.mxu0 %v1719
        %v1931 = vpop.f32.mrf.mxu0
        %v1932 = vadd.f32 %v1743, %v1931
        %v1933 = vpop.f32.mrf.mxu0
        %v1934 = vpop.f32.mrf.mxu0
        %v1935 = vadd.f32 %v1743, %v1934
        %v1936 = vpop.f32.mrf.mxu0
        %1937 = vmatprep.mubr.bf16.mxu0 0
        %1938 = vmatmul.mubr.bf16.gmra.mxu0 %v1720
        %v1939 = vpop.f32.mrf.mxu0
        %v1940 = vadd.f32 %v1743, %v1939
        %v1941 = vpop.f32.mrf.mxu0
        %v1942 = vpop.f32.mrf.mxu0
        %v1943 = vadd.f32 %v1743, %v1942
        %v1944 = vpop.f32.mrf.mxu0
        %1945 = vmatprep.mubr.bf16.mxu0 0
        %1946 = vmatmul.mubr.bf16.gmra.mxu0 %v1721
        %v1947 = vpop.f32.mrf.mxu0
        %v1948 = vadd.f32 %v1743, %v1947
        %v1949 = vpop.f32.mrf.mxu0
        %v1950 = vpop.f32.mrf.mxu0
        %v1951 = vadd.f32 %v1743, %v1950
        %v1952 = vpop.f32.mrf.mxu0
        %1953 = vdwg.mxu0
        %v1954 = vmul.f32 %v1828, 0.5
        %v1955 = vmul.f32 %v1831, 0.5
        %v1956 = vmul.f32 %v1836, 0.5
        %v1957 = vmul.f32 %v1839, 0.5
        %v1958 = vmul.f32 %v1844, 0.5
        %v1959 = vmul.f32 %v1847, 0.5
        %v1960 = vmul.f32 %v1852, 0.5
        %v1961 = vmul.f32 %v1855, 0.5
        %v1962 = vmul.f32 %v1860, 0.5
        %v1963 = vmul.f32 %v1863, 0.5
        %v1964 = vmul.f32 %v1868, 0.5
        %v1965 = vmul.f32 %v1871, 0.5
        %v1966 = vmul.f32 %v1876, 0.5
        %v1967 = vmul.f32 %v1879, 0.5
        %v1968 = vmul.f32 %v1884, 0.5
        %v1969 = vmul.f32 %v1887, 0.5
        %v1970 = vmul.f32 %v1892, 0.5
        %v1971 = vmul.f32 %v1895, 0.5
        %v1972 = vmul.f32 %v1900, 0.5
        %v1973 = vmul.f32 %v1903, 0.5
        %v1974 = vmul.f32 %v1908, 0.5
        %v1975 = vmul.f32 %v1911, 0.5
        %v1976 = vmul.f32 %v1916, 0.5
        %v1977 = vmul.f32 %v1919, 0.5
        %v1978 = vmul.f32 %v1924, 0.5
        %v1979 = vmul.f32 %v1927, 0.5
        %v1980 = vmul.f32 %v1932, 0.5
        %v1981 = vmul.f32 %v1935, 0.5
        %v1982 = vmul.f32 %v1940, 0.5
        %v1983 = vmul.f32 %v1943, 0.5
        %v1984 = vmul.f32 %v1948, 0.5
        %v1985 = vmul.f32 %v1951, 0.5
        %v1986 = vmul.f32 %v1828, 0.70710677
        %v1987 = vmul.f32 %v1831, 0.70710677
        %v1988 = vmul.f32 %v1836, 0.70710677
        %v1989 = vmul.f32 %v1839, 0.70710677
        %v1990 = vmul.f32 %v1844, 0.70710677
        %v1991 = vmul.f32 %v1847, 0.70710677
        %v1992 = vmul.f32 %v1852, 0.70710677
        %v1993 = vmul.f32 %v1855, 0.70710677
        %v1994 = vmul.f32 %v1860, 0.70710677
        %v1995 = vmul.f32 %v1863, 0.70710677
        %v1996 = vmul.f32 %v1868, 0.70710677
        %v1997 = vmul.f32 %v1871, 0.70710677
        %v1998 = vmul.f32 %v1876, 0.70710677
        %v1999 = vmul.f32 %v1879, 0.70710677
        %v2000 = vmul.f32 %v1884, 0.70710677
        %v2001 = vmul.f32 %v1887, 0.70710677
        %v2002 = vmul.f32 %v1892, 0.70710677
        %v2003 = vmul.f32 %v1895, 0.70710677
        %v2004 = vmul.f32 %v1900, 0.70710677
        %v2005 = vmul.f32 %v1903, 0.70710677
        %v2006 = vmul.f32 %v1908, 0.70710677
        %v2007 = vmul.f32 %v1911, 0.70710677
        %v2008 = vmul.f32 %v1916, 0.70710677
        %v2009 = vmul.f32 %v1919, 0.70710677
        %v2010 = vmul.f32 %v1924, 0.70710677
        %v2011 = vmul.f32 %v1927, 0.70710677
        %v2012 = vmul.f32 %v1932, 0.70710677
        %v2013 = vmul.f32 %v1935, 0.70710677
        %v2014 = vmul.f32 %v1940, 0.70710677
        %v2015 = vmul.f32 %v1943, 0.70710677
        %v2016 = vmul.f32 %v1948, 0.70710677
        %v2017 = vmul.f32 %v1951, 0.70710677
        %v2018 = verf.f32.pop %v1986
        %v2019 = verf.f32.pop %v1987
        %v2020 = verf.f32.pop %v1988
        %v2021 = verf.f32.pop %v1989
        %v2022 = verf.f32.pop %v1990
        %v2023 = verf.f32.pop %v1991
        %v2024 = verf.f32.pop %v1992
        %v2025 = verf.f32.pop %v1993
        %v2026 = verf.f32.pop %v1994
        %v2027 = verf.f32.pop %v1995
        %v2028 = verf.f32.pop %v1996
        %v2029 = verf.f32.pop %v1997
        %v2030 = verf.f32.pop %v1998
        %v2031 = verf.f32.pop %v1999
        %v2032 = verf.f32.pop %v2000
        %v2033 = verf.f32.pop %v2001
        %v2034 = verf.f32.pop %v2002
        %v2035 = verf.f32.pop %v2003
        %v2036 = verf.f32.pop %v2004
        %v2037 = verf.f32.pop %v2005
        %v2038 = verf.f32.pop %v2006
        %v2039 = verf.f32.pop %v2007
        %v2040 = verf.f32.pop %v2008
        %v2041 = verf.f32.pop %v2009
        %v2042 = verf.f32.pop %v2010
        %v2043 = verf.f32.pop %v2011
        %v2044 = verf.f32.pop %v2012
        %v2045 = verf.f32.pop %v2013
        %v2046 = verf.f32.pop %v2014
        %v2047 = verf.f32.pop %v2015
        %v2048 = verf.f32.pop %v2016
        %v2049 = verf.f32.pop %v2017
        %v2050 = vadd.f32 %v2018, 1.0
        %v2051 = vadd.f32 %v2019, 1.0
        %v2052 = vadd.f32 %v2020, 1.0
        %v2053 = vadd.f32 %v2021, 1.0
        %v2054 = vadd.f32 %v2022, 1.0
        %v2055 = vadd.f32 %v2023, 1.0
        %v2056 = vadd.f32 %v2024, 1.0
        %v2057 = vadd.f32 %v2025, 1.0
        %v2058 = vadd.f32 %v2026, 1.0
        %v2059 = vadd.f32 %v2027, 1.0
        %v2060 = vadd.f32 %v2028, 1.0
        %v2061 = vadd.f32 %v2029, 1.0
        %v2062 = vadd.f32 %v2030, 1.0
        %v2063 = vadd.f32 %v2031, 1.0
        %v2064 = vadd.f32 %v2032, 1.0
        %v2065 = vadd.f32 %v2033, 1.0
        %v2066 = vadd.f32 %v2034, 1.0
        %v2067 = vadd.f32 %v2035, 1.0
        %v2068 = vadd.f32 %v2036, 1.0
        %v2069 = vadd.f32 %v2037, 1.0
        %v2070 = vadd.f32 %v2038, 1.0
        %v2071 = vadd.f32 %v2039, 1.0
        %v2072 = vadd.f32 %v2040, 1.0
        %v2073 = vadd.f32 %v2041, 1.0
        %v2074 = vadd.f32 %v2042, 1.0
        %v2075 = vadd.f32 %v2043, 1.0
        %v2076 = vadd.f32 %v2044, 1.0
        %v2077 = vadd.f32 %v2045, 1.0
        %v2078 = vadd.f32 %v2046, 1.0
        %v2079 = vadd.f32 %v2047, 1.0
        %v2080 = vadd.f32 %v2048, 1.0
        %v2081 = vadd.f32 %v2049, 1.0
        %v2082 = vmul.f32 %v1954, %v2050
        %v2083 = vmul.f32 %v1955, %v2051
        %v2084 = vmul.f32 %v1956, %v2052
        %v2085 = vmul.f32 %v1957, %v2053
        %v2086 = vmul.f32 %v1958, %v2054
        %v2087 = vmul.f32 %v1959, %v2055
        %v2088 = vmul.f32 %v1960, %v2056
        %v2089 = vmul.f32 %v1961, %v2057
        %v2090 = vmul.f32 %v1962, %v2058
        %v2091 = vmul.f32 %v1963, %v2059
        %v2092 = vmul.f32 %v1964, %v2060
        %v2093 = vmul.f32 %v1965, %v2061
        %v2094 = vmul.f32 %v1966, %v2062
        %v2095 = vmul.f32 %v1967, %v2063
        %v2096 = vmul.f32 %v1968, %v2064
        %v2097 = vmul.f32 %v1969, %v2065
        %v2098 = vmul.f32 %v1970, %v2066
        %v2099 = vmul.f32 %v1971, %v2067
        %v2100 = vmul.f32 %v1972, %v2068
        %v2101 = vmul.f32 %v1973, %v2069
        %v2102 = vmul.f32 %v1974, %v2070
        %v2103 = vmul.f32 %v1975, %v2071
        %v2104 = vmul.f32 %v1976, %v2072
        %v2105 = vmul.f32 %v1977, %v2073
        %v2106 = vmul.f32 %v1978, %v2074
        %v2107 = vmul.f32 %v1979, %v2075
        %v2108 = vmul.f32 %v1980, %v2076
        %v2109 = vmul.f32 %v1981, %v2077
        %v2110 = vmul.f32 %v1982, %v2078
        %v2111 = vmul.f32 %v1983, %v2079
        %v2112 = vmul.f32 %v1984, %v2080
        %v2113 = vmul.f32 %v1985, %v2081
        %v2114 = vpack.c.bf16 %v2083, %v2082
        %v2115 = vpack.c.bf16 %v2085, %v2084
        %v2116 = vpack.c.bf16 %v2087, %v2086
        %v2117 = vpack.c.bf16 %v2089, %v2088
        %v2118 = vpack.c.bf16 %v2091, %v2090
        %v2119 = vpack.c.bf16 %v2093, %v2092
        %v2120 = vpack.c.bf16 %v2095, %v2094
        %v2121 = vpack.c.bf16 %v2097, %v2096
        %v2122 = vpack.c.bf16 %v2099, %v2098
        %v2123 = vpack.c.bf16 %v2101, %v2100
        %v2124 = vpack.c.bf16 %v2103, %v2102
        %v2125 = vpack.c.bf16 %v2105, %v2104
        %v2126 = vpack.c.bf16 %v2107, %v2106
        %v2127 = vpack.c.bf16 %v2109, %v2108
        %v2128 = vpack.c.bf16 %v2111, %v2110
        %v2129 = vpack.c.bf16 %v2113, %v2112
        %v2130 = vld [vmem:[%s9] sm:$0xf]
        %v2131 = vld [vmem:[%s9 + $0x4] sm:$0xf]
        %v2132 = vld [vmem:[%s9 + $0x8] sm:$0xf]
        %v2133 = vld [vmem:[%s9 + $0xc] sm:$0xf]
        %v2134 = vld [vmem:[%s9 + $0x10] sm:$0xf]
        %v2135 = vld [vmem:[%s9 + $0x14] sm:$0xf]
        %v2136 = vld [vmem:[%s9 + $0x18] sm:$0xf]
        %v2137 = vld [vmem:[%s9 + $0x1c] sm:$0xf]
        %v2138 = vld [vmem:[%s9 + $0x20] sm:$0xf]
        %v2139 = vld [vmem:[%s9 + $0x24] sm:$0xf]
        %v2140 = vld [vmem:[%s9 + $0x28] sm:$0xf]
        %v2141 = vld [vmem:[%s9 + $0x2c] sm:$0xf]
        %v2142 = vld [vmem:[%s9 + $0x30] sm:$0xf]
        %v2143 = vld [vmem:[%s9 + $0x34] sm:$0xf]
        %v2144 = vld [vmem:[%s9 + $0x38] sm:$0xf]
        %v2145 = vld [vmem:[%s9 + $0x3c] sm:$0xf]
        %v2146 = vld [vmem:[%s10] sm:$0x1]
        %v2148 = vlaneseq
        %v2149 = vshrl.u32 %v2148, 7
        %v2150 = vsub.s32 0, %v2149
        %v2151 = vrot.slane %v2146, %v2150
        %v2169 = vunpack.c.l.b16 %v2130
        %v2170 = vunpack.c.l.b16 %v2131
        %v2171 = vunpack.c.l.b16 %v2132
        %v2172 = vunpack.c.l.b16 %v2133
        %v2173 = vunpack.c.l.b16 %v2134
        %v2174 = vunpack.c.l.b16 %v2135
        %v2175 = vunpack.c.l.b16 %v2136
        %v2176 = vunpack.c.l.b16 %v2137
        %v2177 = vunpack.c.l.b16 %v2138
        %v2178 = vunpack.c.l.b16 %v2139
        %v2179 = vunpack.c.l.b16 %v2140
        %v2180 = vunpack.c.l.b16 %v2141
        %v2181 = vunpack.c.l.b16 %v2142
        %v2182 = vunpack.c.l.b16 %v2143
        %v2183 = vunpack.c.l.b16 %v2144
        %v2184 = vunpack.c.l.b16 %v2145
        %v2185 = vpack.c.b16 %v2170, %v2169
        %v2186 = vpack.c.b16 %v2172, %v2171
        %v2187 = vpack.c.b16 %v2174, %v2173
        %v2188 = vpack.c.b16 %v2176, %v2175
        %v2189 = vpack.c.b16 %v2178, %v2177
        %v2190 = vpack.c.b16 %v2180, %v2179
        %v2191 = vpack.c.b16 %v2182, %v2181
        %v2192 = vpack.c.b16 %v2184, %v2183
        %2201 = vmatprep.subr.bf16.mxu0 0
        %2202 = vmatpush1.bf16.msra.mxu0 %v2192
        %2203 = vmatprep.subr.bf16.mxu0 0
        %2204 = vmatpush1.bf16.msra.mxu0 %v2191
        %2205 = vmatprep.subr.bf16.mxu0 0
        %2206 = vmatpush1.bf16.msra.mxu0 %v2190
        %2207 = vmatprep.subr.bf16.mxu0 0
        %2208 = vmatpush1.bf16.msra.mxu0 %v2189
        %2209 = vmatprep.subr.bf16.mxu0 0
        %2210 = vmatpush1.bf16.msra.mxu0 %v2188
        %2211 = vmatprep.subr.bf16.mxu0 0
        %2212 = vmatpush1.bf16.msra.mxu0 %v2187
        %2213 = vmatprep.subr.bf16.mxu0 0
        %2214 = vmatpush1.bf16.msra.mxu0 %v2186
        %2215 = vmatprep.subr.bf16.mxu0 0
        %2216 = vmatpush1.bf16.msra.mxu0 %v2185
        %2217 = vmatprep.subr.bf16.mxu0 0
        %2218 = vmatpush2.bf16.msra.mxu0 0
        %2219 = vmatprep.subr.bf16.mxu0 0
        %2220 = vmatpush2.bf16.msra.mxu0 0
        %2221 = vmatprep.subr.bf16.mxu0 0
        %2222 = vmatpush2.bf16.msra.mxu0 0
        %2223 = vmatprep.subr.bf16.mxu0 0
        %2224 = vmatpush2.bf16.msra.mxu0 0
        %2225 = vmatprep.subr.bf16.mxu0 0
        %2226 = vmatpush2.bf16.msra.mxu0 0
        %2227 = vmatprep.subr.bf16.mxu0 0
        %2228 = vmatpush2.bf16.msra.mxu0 0
        %2229 = vmatprep.subr.bf16.mxu0 0
        %2230 = vmatpush2.bf16.msra.mxu0 0
        %2231 = vmatprep.subr.bf16.mxu0 0
        %2232 = vmatpush2.bf16.msra.mxu0 0
        %2233 = vmatprep.mubr.bf16.mxu0 0
        %2234 = vmatmul.mubr.bf16.gmra.mxu0 %v2114
        %v2235 = vpop.f32.mrf.mxu0
        %v2236 = vadd.f32 %v2151, %v2235
        %v2237 = vpop.f32.mrf.mxu0
        %v2238 = vpop.f32.mrf.mxu0
        %v2239 = vadd.f32 %v2151, %v2238
        %v2240 = vpop.f32.mrf.mxu0
        %2241 = vmatprep.mubr.bf16.mxu0 0
        %2242 = vmatmul.mubr.bf16.gmra.mxu0 %v2115
        %v2243 = vpop.f32.mrf.mxu0
        %v2244 = vadd.f32 %v2151, %v2243
        %v2245 = vpop.f32.mrf.mxu0
        %v2246 = vpop.f32.mrf.mxu0
        %v2247 = vadd.f32 %v2151, %v2246
        %v2248 = vpop.f32.mrf.mxu0
        %2249 = vmatprep.mubr.bf16.mxu0 0
        %2250 = vmatmul.mubr.bf16.gmra.mxu0 %v2116
        %v2251 = vpop.f32.mrf.mxu0
        %v2252 = vadd.f32 %v2151, %v2251
        %v2253 = vpop.f32.mrf.mxu0
        %v2254 = vpop.f32.mrf.mxu0
        %v2255 = vadd.f32 %v2151, %v2254
        %v2256 = vpop.f32.mrf.mxu0
        %2257 = vmatprep.mubr.bf16.mxu0 0
        %2258 = vmatmul.mubr.bf16.gmra.mxu0 %v2117
        %v2259 = vpop.f32.mrf.mxu0
        %v2260 = vadd.f32 %v2151, %v2259
        %v2261 = vpop.f32.mrf.mxu0
        %v2262 = vpop.f32.mrf.mxu0
        %v2263 = vadd.f32 %v2151, %v2262
        %v2264 = vpop.f32.mrf.mxu0
        %2265 = vmatprep.mubr.bf16.mxu0 0
        %2266 = vmatmul.mubr.bf16.gmra.mxu0 %v2118
        %v2267 = vpop.f32.mrf.mxu0
        %v2268 = vadd.f32 %v2151, %v2267
        %v2269 = vpop.f32.mrf.mxu0
        %v2270 = vpop.f32.mrf.mxu0
        %v2271 = vadd.f32 %v2151, %v2270
        %v2272 = vpop.f32.mrf.mxu0
        %2273 = vmatprep.mubr.bf16.mxu0 0
        %2274 = vmatmul.mubr.bf16.gmra.mxu0 %v2119
        %v2275 = vpop.f32.mrf.mxu0
        %v2276 = vadd.f32 %v2151, %v2275
        %v2277 = vpop.f32.mrf.mxu0
        %v2278 = vpop.f32.mrf.mxu0
        %v2279 = vadd.f32 %v2151, %v2278
        %v2280 = vpop.f32.mrf.mxu0
        %2281 = vmatprep.mubr.bf16.mxu0 0
        %2282 = vmatmul.mubr.bf16.gmra.mxu0 %v2120
        %v2283 = vpop.f32.mrf.mxu0
        %v2284 = vadd.f32 %v2151, %v2283
        %v2285 = vpop.f32.mrf.mxu0
        %v2286 = vpop.f32.mrf.mxu0
        %v2287 = vadd.f32 %v2151, %v2286
        %v2288 = vpop.f32.mrf.mxu0
        %2289 = vmatprep.mubr.bf16.mxu0 0
        %2290 = vmatmul.mubr.bf16.gmra.mxu0 %v2121
        %v2291 = vpop.f32.mrf.mxu0
        %v2292 = vadd.f32 %v2151, %v2291
        %v2293 = vpop.f32.mrf.mxu0
        %v2294 = vpop.f32.mrf.mxu0
        %v2295 = vadd.f32 %v2151, %v2294
        %v2296 = vpop.f32.mrf.mxu0
        %2297 = vmatprep.mubr.bf16.mxu0 0
        %2298 = vmatmul.mubr.bf16.gmra.mxu0 %v2122
        %v2299 = vpop.f32.mrf.mxu0
        %v2300 = vadd.f32 %v2151, %v2299
        %v2301 = vpop.f32.mrf.mxu0
        %v2302 = vpop.f32.mrf.mxu0
        %v2303 = vadd.f32 %v2151, %v2302
        %v2304 = vpop.f32.mrf.mxu0
        %2305 = vmatprep.mubr.bf16.mxu0 0
        %2306 = vmatmul.mubr.bf16.gmra.mxu0 %v2123
        %v2307 = vpop.f32.mrf.mxu0
        %v2308 = vadd.f32 %v2151, %v2307
        %v2309 = vpop.f32.mrf.mxu0
        %v2310 = vpop.f32.mrf.mxu0
        %v2311 = vadd.f32 %v2151, %v2310
        %v2312 = vpop.f32.mrf.mxu0
        %2313 = vmatprep.mubr.bf16.mxu0 0
        %2314 = vmatmul.mubr.bf16.gmra.mxu0 %v2124
        %v2315 = vpop.f32.mrf.mxu0
        %v2316 = vadd.f32 %v2151, %v2315
        %v2317 = vpop.f32.mrf.mxu0
        %v2318 = vpop.f32.mrf.mxu0
        %v2319 = vadd.f32 %v2151, %v2318
        %v2320 = vpop.f32.mrf.mxu0
        %2321 = vmatprep.mubr.bf16.mxu0 0
        %2322 = vmatmul.mubr.bf16.gmra.mxu0 %v2125
        %v2323 = vpop.f32.mrf.mxu0
        %v2324 = vadd.f32 %v2151, %v2323
        %v2325 = vpop.f32.mrf.mxu0
        %v2326 = vpop.f32.mrf.mxu0
        %v2327 = vadd.f32 %v2151, %v2326
        %v2328 = vpop.f32.mrf.mxu0
        %2329 = vmatprep.mubr.bf16.mxu0 0
        %2330 = vmatmul.mubr.bf16.gmra.mxu0 %v2126
        %v2331 = vpop.f32.mrf.mxu0
        %v2332 = vadd.f32 %v2151, %v2331
        %v2333 = vpop.f32.mrf.mxu0
        %v2334 = vpop.f32.mrf.mxu0
        %v2335 = vadd.f32 %v2151, %v2334
        %v2336 = vpop.f32.mrf.mxu0
        %2337 = vmatprep.mubr.bf16.mxu0 0
        %2338 = vmatmul.mubr.bf16.gmra.mxu0 %v2127
        %v2339 = vpop.f32.mrf.mxu0
        %v2340 = vadd.f32 %v2151, %v2339
        %v2341 = vpop.f32.mrf.mxu0
        %v2342 = vpop.f32.mrf.mxu0
        %v2343 = vadd.f32 %v2151, %v2342
        %v2344 = vpop.f32.mrf.mxu0
        %2345 = vmatprep.mubr.bf16.mxu0 0
        %2346 = vmatmul.mubr.bf16.gmra.mxu0 %v2128
        %v2347 = vpop.f32.mrf.mxu0
        %v2348 = vadd.f32 %v2151, %v2347
        %v2349 = vpop.f32.mrf.mxu0
        %v2350 = vpop.f32.mrf.mxu0
        %v2351 = vadd.f32 %v2151, %v2350
        %v2352 = vpop.f32.mrf.mxu0
        %2353 = vmatprep.mubr.bf16.mxu0 0
        %2354 = vmatmul.mubr.bf16.gmra.mxu0 %v2129
        %v2355 = vpop.f32.mrf.mxu0
        %v2356 = vadd.f32 %v2151, %v2355
        %v2357 = vpop.f32.mrf.mxu0
        %v2358 = vpop.f32.mrf.mxu0
        %v2359 = vadd.f32 %v2151, %v2358
        %v2360 = vpop.f32.mrf.mxu0
        %2361 = vdwg.mxu0
        %v2362 = vmul.f32 %v2236, 0.5
        %v2363 = vmul.f32 %v2239, 0.5
        %v2364 = vmul.f32 %v2244, 0.5
        %v2365 = vmul.f32 %v2247, 0.5
        %v2366 = vmul.f32 %v2252, 0.5
        %v2367 = vmul.f32 %v2255, 0.5
        %v2368 = vmul.f32 %v2260, 0.5
        %v2369 = vmul.f32 %v2263, 0.5
        %v2370 = vmul.f32 %v2268, 0.5
        %v2371 = vmul.f32 %v2271, 0.5
        %v2372 = vmul.f32 %v2276, 0.5
        %v2373 = vmul.f32 %v2279, 0.5
        %v2374 = vmul.f32 %v2284, 0.5
        %v2375 = vmul.f32 %v2287, 0.5
        %v2376 = vmul.f32 %v2292, 0.5
        %v2377 = vmul.f32 %v2295, 0.5
        %v2378 = vmul.f32 %v2300, 0.5
        %v2379 = vmul.f32 %v2303, 0.5
        %v2380 = vmul.f32 %v2308, 0.5
        %v2381 = vmul.f32 %v2311, 0.5
        %v2382 = vmul.f32 %v2316, 0.5
        %v2383 = vmul.f32 %v2319, 0.5
        %v2384 = vmul.f32 %v2324, 0.5
        %v2385 = vmul.f32 %v2327, 0.5
        %v2386 = vmul.f32 %v2332, 0.5
        %v2387 = vmul.f32 %v2335, 0.5
        %v2388 = vmul.f32 %v2340, 0.5
        %v2389 = vmul.f32 %v2343, 0.5
        %v2390 = vmul.f32 %v2348, 0.5
        %v2391 = vmul.f32 %v2351, 0.5
        %v2392 = vmul.f32 %v2356, 0.5
        %v2393 = vmul.f32 %v2359, 0.5
        %v2394 = vmul.f32 %v2236, 0.70710677
        %v2395 = vmul.f32 %v2239, 0.70710677
        %v2396 = vmul.f32 %v2244, 0.70710677
        %v2397 = vmul.f32 %v2247, 0.70710677
        %v2398 = vmul.f32 %v2252, 0.70710677
        %v2399 = vmul.f32 %v2255, 0.70710677
        %v2400 = vmul.f32 %v2260, 0.70710677
        %v2401 = vmul.f32 %v2263, 0.70710677
        %v2402 = vmul.f32 %v2268, 0.70710677
        %v2403 = vmul.f32 %v2271, 0.70710677
        %v2404 = vmul.f32 %v2276, 0.70710677
        %v2405 = vmul.f32 %v2279, 0.70710677
        %v2406 = vmul.f32 %v2284, 0.70710677
        %v2407 = vmul.f32 %v2287, 0.70710677
        %v2408 = vmul.f32 %v2292, 0.70710677
        %v2409 = vmul.f32 %v2295, 0.70710677
        %v2410 = vmul.f32 %v2300, 0.70710677
        %v2411 = vmul.f32 %v2303, 0.70710677
        %v2412 = vmul.f32 %v2308, 0.70710677
        %v2413 = vmul.f32 %v2311, 0.70710677
        %v2414 = vmul.f32 %v2316, 0.70710677
        %v2415 = vmul.f32 %v2319, 0.70710677
        %v2416 = vmul.f32 %v2324, 0.70710677
        %v2417 = vmul.f32 %v2327, 0.70710677
        %v2418 = vmul.f32 %v2332, 0.70710677
        %v2419 = vmul.f32 %v2335, 0.70710677
        %v2420 = vmul.f32 %v2340, 0.70710677
        %v2421 = vmul.f32 %v2343, 0.70710677
        %v2422 = vmul.f32 %v2348, 0.70710677
        %v2423 = vmul.f32 %v2351, 0.70710677
        %v2424 = vmul.f32 %v2356, 0.70710677
        %v2425 = vmul.f32 %v2359, 0.70710677
        %v2426 = verf.f32.pop %v2394
        %v2427 = verf.f32.pop %v2395
        %v2428 = verf.f32.pop %v2396
        %v2429 = verf.f32.pop %v2397
        %v2430 = verf.f32.pop %v2398
        %v2431 = verf.f32.pop %v2399
        %v2432 = verf.f32.pop %v2400
        %v2433 = verf.f32.pop %v2401
        %v2434 = verf.f32.pop %v2402
        %v2435 = verf.f32.pop %v2403
        %v2436 = verf.f32.pop %v2404
        %v2437 = verf.f32.pop %v2405
        %v2438 = verf.f32.pop %v2406
        %v2439 = verf.f32.pop %v2407
        %v2440 = verf.f32.pop %v2408
        %v2441 = verf.f32.pop %v2409
        %v2442 = verf.f32.pop %v2410
        %v2443 = verf.f32.pop %v2411
        %v2444 = verf.f32.pop %v2412
        %v2445 = verf.f32.pop %v2413
        %v2446 = verf.f32.pop %v2414
        %v2447 = verf.f32.pop %v2415
        %v2448 = verf.f32.pop %v2416
        %v2449 = verf.f32.pop %v2417
        %v2450 = verf.f32.pop %v2418
        %v2451 = verf.f32.pop %v2419
        %v2452 = verf.f32.pop %v2420
        %v2453 = verf.f32.pop %v2421
        %v2454 = verf.f32.pop %v2422
        %v2455 = verf.f32.pop %v2423
        %v2456 = verf.f32.pop %v2424
        %v2457 = verf.f32.pop %v2425
        %v2458 = vadd.f32 %v2426, 1.0
        %v2459 = vadd.f32 %v2427, 1.0
        %v2460 = vadd.f32 %v2428, 1.0
        %v2461 = vadd.f32 %v2429, 1.0
        %v2462 = vadd.f32 %v2430, 1.0
        %v2463 = vadd.f32 %v2431, 1.0
        %v2464 = vadd.f32 %v2432, 1.0
        %v2465 = vadd.f32 %v2433, 1.0
        %v2466 = vadd.f32 %v2434, 1.0
        %v2467 = vadd.f32 %v2435, 1.0
        %v2468 = vadd.f32 %v2436, 1.0
        %v2469 = vadd.f32 %v2437, 1.0
        %v2470 = vadd.f32 %v2438, 1.0
        %v2471 = vadd.f32 %v2439, 1.0
        %v2472 = vadd.f32 %v2440, 1.0
        %v2473 = vadd.f32 %v2441, 1.0
        %v2474 = vadd.f32 %v2442, 1.0
        %v2475 = vadd.f32 %v2443, 1.0
        %v2476 = vadd.f32 %v2444, 1.0
        %v2477 = vadd.f32 %v2445, 1.0
        %v2478 = vadd.f32 %v2446, 1.0
        %v2479 = vadd.f32 %v2447, 1.0
        %v2480 = vadd.f32 %v2448, 1.0
        %v2481 = vadd.f32 %v2449, 1.0
        %v2482 = vadd.f32 %v2450, 1.0
        %v2483 = vadd.f32 %v2451, 1.0
        %v2484 = vadd.f32 %v2452, 1.0
        %v2485 = vadd.f32 %v2453, 1.0
        %v2486 = vadd.f32 %v2454, 1.0
        %v2487 = vadd.f32 %v2455, 1.0
        %v2488 = vadd.f32 %v2456, 1.0
        %v2489 = vadd.f32 %v2457, 1.0
        %v2490 = vmul.f32 %v2362, %v2458
        %v2491 = vmul.f32 %v2363, %v2459
        %v2492 = vmul.f32 %v2364, %v2460
        %v2493 = vmul.f32 %v2365, %v2461
        %v2494 = vmul.f32 %v2366, %v2462
        %v2495 = vmul.f32 %v2367, %v2463
        %v2496 = vmul.f32 %v2368, %v2464
        %v2497 = vmul.f32 %v2369, %v2465
        %v2498 = vmul.f32 %v2370, %v2466
        %v2499 = vmul.f32 %v2371, %v2467
        %v2500 = vmul.f32 %v2372, %v2468
        %v2501 = vmul.f32 %v2373, %v2469
        %v2502 = vmul.f32 %v2374, %v2470
        %v2503 = vmul.f32 %v2375, %v2471
        %v2504 = vmul.f32 %v2376, %v2472
        %v2505 = vmul.f32 %v2377, %v2473
        %v2506 = vmul.f32 %v2378, %v2474
        %v2507 = vmul.f32 %v2379, %v2475
        %v2508 = vmul.f32 %v2380, %v2476
        %v2509 = vmul.f32 %v2381, %v2477
        %v2510 = vmul.f32 %v2382, %v2478
        %v2511 = vmul.f32 %v2383, %v2479
        %v2512 = vmul.f32 %v2384, %v2480
        %v2513 = vmul.f32 %v2385, %v2481
        %v2514 = vmul.f32 %v2386, %v2482
        %v2515 = vmul.f32 %v2387, %v2483
        %v2516 = vmul.f32 %v2388, %v2484
        %v2517 = vmul.f32 %v2389, %v2485
        %v2518 = vmul.f32 %v2390, %v2486
        %v2519 = vmul.f32 %v2391, %v2487
        %v2520 = vmul.f32 %v2392, %v2488
        %v2521 = vmul.f32 %v2393, %v2489
        %v2522 = vpack.c.bf16 %v2491, %v2490
        %v2523 = vpack.c.bf16 %v2493, %v2492
        %v2524 = vpack.c.bf16 %v2495, %v2494
        %v2525 = vpack.c.bf16 %v2497, %v2496
        %v2526 = vpack.c.bf16 %v2499, %v2498
        %v2527 = vpack.c.bf16 %v2501, %v2500
        %v2528 = vpack.c.bf16 %v2503, %v2502
        %v2529 = vpack.c.bf16 %v2505, %v2504
        %v2530 = vpack.c.bf16 %v2507, %v2506
        %v2531 = vpack.c.bf16 %v2509, %v2508
        %v2532 = vpack.c.bf16 %v2511, %v2510
        %v2533 = vpack.c.bf16 %v2513, %v2512
        %v2534 = vpack.c.bf16 %v2515, %v2514
        %v2535 = vpack.c.bf16 %v2517, %v2516
        %v2536 = vpack.c.bf16 %v2519, %v2518
        %v2537 = vpack.c.bf16 %v2521, %v2520
        %v2538 = vld [vmem:[%s11] sm:$0xf]
        %v2539 = vld [vmem:[%s11 + $0x4] sm:$0xf]
        %v2540 = vld [vmem:[%s11 + $0x8] sm:$0xf]
        %v2541 = vld [vmem:[%s11 + $0xc] sm:$0xf]
        %v2542 = vld [vmem:[%s11 + $0x10] sm:$0xf]
        %v2543 = vld [vmem:[%s11 + $0x14] sm:$0xf]
        %v2544 = vld [vmem:[%s11 + $0x18] sm:$0xf]
        %v2545 = vld [vmem:[%s11 + $0x1c] sm:$0xf]
        %v2546 = vld [vmem:[%s12] sm:$0x1]
        %v2548 = vlaneseq
        %v2549 = vshrl.u32 %v2548, 7
        %v2550 = vsub.s32 0, %v2549
        %v2551 = vrot.slane %v2546, %v2550
        %v2561 = vunpack.c.l.b16 %v2538
        %v2562 = vunpack.c.l.b16 %v2539
        %v2563 = vunpack.c.l.b16 %v2540
        %v2564 = vunpack.c.l.b16 %v2541
        %v2565 = vunpack.c.l.b16 %v2542
        %v2566 = vunpack.c.l.b16 %v2543
        %v2567 = vunpack.c.l.b16 %v2544
        %v2568 = vunpack.c.l.b16 %v2545
        %v2569 = vpack.c.b16 %v2562, %v2561
        %v2570 = vpack.c.b16 %v2564, %v2563
        %v2571 = vpack.c.b16 %v2566, %v2565
        %v2572 = vpack.c.b16 %v2568, %v2567
        %v2578 = vsel %vm928, %v2522, 0
        %v2581 = vsel %vm928, %v2523, 0
        %v2584 = vsel %vm928, %v2524, 0
        %v2587 = vsel %vm928, %v2525, 0
        %v2590 = vsel %vm928, %v2526, 0
        %v2593 = vsel %vm928, %v2527, 0
        %v2596 = vsel %vm928, %v2528, 0
        %v2599 = vsel %vm928, %v2529, 0
        %v2602 = vsel %vm928, %v2530, 0
        %v2605 = vsel %vm928, %v2531, 0
        %v2608 = vsel %vm928, %v2532, 0
        %v2611 = vsel %vm928, %v2533, 0
        %v2614 = vsel %vm928, %v2534, 0
        %v2617 = vsel %vm928, %v2535, 0
        %v2620 = vsel %vm928, %v2536, 0
        %v2623 = vsel %vm928, %v2537, 0
        %2625 = vmatprep.subr.bf16.mxu0 0
        %2626 = vmatpush1.bf16.msra.mxu0 0
        %2627 = vmatprep.subr.bf16.mxu0 0
        %2628 = vmatpush1.bf16.msra.mxu0 0
        %2629 = vmatprep.subr.bf16.mxu0 0
        %2630 = vmatpush1.bf16.msra.mxu0 0
        %2631 = vmatprep.subr.bf16.mxu0 0
        %2632 = vmatpush1.bf16.msra.mxu0 0
        %2633 = vmatprep.subr.bf16.mxu0 0
        %2634 = vmatpush1.bf16.msra.mxu0 %v2572
        %2635 = vmatprep.subr.bf16.mxu0 0
        %2636 = vmatpush1.bf16.msra.mxu0 %v2571
        %2637 = vmatprep.subr.bf16.mxu0 0
        %2638 = vmatpush1.bf16.msra.mxu0 %v2570
        %2639 = vmatprep.subr.bf16.mxu0 0
        %2640 = vmatpush1.bf16.msra.mxu0 %v2569
        %2641 = vmatprep.subr.bf16.mxu0 0
        %2642 = vmatpush2.bf16.msra.mxu0 0
        %2643 = vmatprep.subr.bf16.mxu0 0
        %2644 = vmatpush2.bf16.msra.mxu0 0
        %2645 = vmatprep.subr.bf16.mxu0 0
        %2646 = vmatpush2.bf16.msra.mxu0 0
        %2647 = vmatprep.subr.bf16.mxu0 0
        %2648 = vmatpush2.bf16.msra.mxu0 0
        %2649 = vmatprep.subr.bf16.mxu0 0
        %2650 = vmatpush2.bf16.msra.mxu0 0
        %2651 = vmatprep.subr.bf16.mxu0 0
        %2652 = vmatpush2.bf16.msra.mxu0 0
        %2653 = vmatprep.subr.bf16.mxu0 0
        %2654 = vmatpush2.bf16.msra.mxu0 0
        %2655 = vmatprep.subr.bf16.mxu0 0
        %2656 = vmatpush2.bf16.msra.mxu0 0
        %2657 = vmatprep.mubr.bf16.mxu0 0
        %2658 = vmatmul.mubr.bf16.gmra.mxu0 %v2578
        %v2659 = vpop.f32.mrf.mxu0
        %v2660 = vadd.f32 %v2551, %v2659
        %v2661 = vpop.f32.mrf.mxu0
        %v2662 = vpop.f32.mrf.mxu0
        %v2663 = vadd.f32 %v2551, %v2662
        %v2664 = vpop.f32.mrf.mxu0
        %2665 = vmatprep.mubr.bf16.mxu0 0
        %2666 = vmatmul.mubr.bf16.gmra.mxu0 %v2581
        %v2667 = vpop.f32.mrf.mxu0
        %v2668 = vadd.f32 %v2551, %v2667
        %v2669 = vpop.f32.mrf.mxu0
        %v2670 = vpop.f32.mrf.mxu0
        %v2671 = vadd.f32 %v2551, %v2670
        %v2672 = vpop.f32.mrf.mxu0
        %2673 = vmatprep.mubr.bf16.mxu0 0
        %2674 = vmatmul.mubr.bf16.gmra.mxu0 %v2584
        %v2675 = vpop.f32.mrf.mxu0
        %v2676 = vadd.f32 %v2551, %v2675
        %v2677 = vpop.f32.mrf.mxu0
        %v2678 = vpop.f32.mrf.mxu0
        %v2679 = vadd.f32 %v2551, %v2678
        %v2680 = vpop.f32.mrf.mxu0
        %2681 = vmatprep.mubr.bf16.mxu0 0
        %2682 = vmatmul.mubr.bf16.gmra.mxu0 %v2587
        %v2683 = vpop.f32.mrf.mxu0
        %v2684 = vadd.f32 %v2551, %v2683
        %v2685 = vpop.f32.mrf.mxu0
        %v2686 = vpop.f32.mrf.mxu0
        %v2687 = vadd.f32 %v2551, %v2686
        %v2688 = vpop.f32.mrf.mxu0
        %2689 = vmatprep.mubr.bf16.mxu0 0
        %2690 = vmatmul.mubr.bf16.gmra.mxu0 %v2590
        %v2691 = vpop.f32.mrf.mxu0
        %v2692 = vadd.f32 %v2551, %v2691
        %v2693 = vpop.f32.mrf.mxu0
        %v2694 = vpop.f32.mrf.mxu0
        %v2695 = vadd.f32 %v2551, %v2694
        %v2696 = vpop.f32.mrf.mxu0
        %2697 = vmatprep.mubr.bf16.mxu0 0
        %2698 = vmatmul.mubr.bf16.gmra.mxu0 %v2593
        %v2699 = vpop.f32.mrf.mxu0
        %v2700 = vadd.f32 %v2551, %v2699
        %v2701 = vpop.f32.mrf.mxu0
        %v2702 = vpop.f32.mrf.mxu0
        %v2703 = vadd.f32 %v2551, %v2702
        %v2704 = vpop.f32.mrf.mxu0
        %2705 = vmatprep.mubr.bf16.mxu0 0
        %2706 = vmatmul.mubr.bf16.gmra.mxu0 %v2596
        %v2707 = vpop.f32.mrf.mxu0
        %v2708 = vadd.f32 %v2551, %v2707
        %v2709 = vpop.f32.mrf.mxu0
        %v2710 = vpop.f32.mrf.mxu0
        %v2711 = vadd.f32 %v2551, %v2710
        %v2712 = vpop.f32.mrf.mxu0
        %2713 = vmatprep.mubr.bf16.mxu0 0
        %2714 = vmatmul.mubr.bf16.gmra.mxu0 %v2599
        %v2715 = vpop.f32.mrf.mxu0
        %v2716 = vadd.f32 %v2551, %v2715
        %v2717 = vpop.f32.mrf.mxu0
        %v2718 = vpop.f32.mrf.mxu0
        %v2719 = vadd.f32 %v2551, %v2718
        %v2720 = vpop.f32.mrf.mxu0
        %2721 = vmatprep.mubr.bf16.mxu0 0
        %2722 = vmatmul.mubr.bf16.gmra.mxu0 %v2602
        %v2723 = vpop.f32.mrf.mxu0
        %v2724 = vadd.f32 %v2551, %v2723
        %v2725 = vpop.f32.mrf.mxu0
        %v2726 = vpop.f32.mrf.mxu0
        %v2727 = vadd.f32 %v2551, %v2726
        %v2728 = vpop.f32.mrf.mxu0
        %2729 = vmatprep.mubr.bf16.mxu0 0
        %2730 = vmatmul.mubr.bf16.gmra.mxu0 %v2605
        %v2731 = vpop.f32.mrf.mxu0
        %v2732 = vadd.f32 %v2551, %v2731
        %v2733 = vpop.f32.mrf.mxu0
        %v2734 = vpop.f32.mrf.mxu0
        %v2735 = vadd.f32 %v2551, %v2734
        %v2736 = vpop.f32.mrf.mxu0
        %2737 = vmatprep.mubr.bf16.mxu0 0
        %2738 = vmatmul.mubr.bf16.gmra.mxu0 %v2608
        %v2739 = vpop.f32.mrf.mxu0
        %v2740 = vadd.f32 %v2551, %v2739
        %v2741 = vpop.f32.mrf.mxu0
        %v2742 = vpop.f32.mrf.mxu0
        %v2743 = vadd.f32 %v2551, %v2742
        %v2744 = vpop.f32.mrf.mxu0
        %2745 = vmatprep.mubr.bf16.mxu0 0
        %2746 = vmatmul.mubr.bf16.gmra.mxu0 %v2611
        %v2747 = vpop.f32.mrf.mxu0
        %v2748 = vadd.f32 %v2551, %v2747
        %v2749 = vpop.f32.mrf.mxu0
        %v2750 = vpop.f32.mrf.mxu0
        %v2751 = vadd.f32 %v2551, %v2750
        %v2752 = vpop.f32.mrf.mxu0
        %2753 = vmatprep.mubr.bf16.mxu0 0
        %2754 = vmatmul.mubr.bf16.gmra.mxu0 %v2614
        %v2755 = vpop.f32.mrf.mxu0
        %v2756 = vadd.f32 %v2551, %v2755
        %v2757 = vpop.f32.mrf.mxu0
        %v2758 = vpop.f32.mrf.mxu0
        %v2759 = vadd.f32 %v2551, %v2758
        %v2760 = vpop.f32.mrf.mxu0
        %2761 = vmatprep.mubr.bf16.mxu0 0
        %2762 = vmatmul.mubr.bf16.gmra.mxu0 %v2617
        %v2763 = vpop.f32.mrf.mxu0
        %v2764 = vadd.f32 %v2551, %v2763
        %v2765 = vpop.f32.mrf.mxu0
        %v2766 = vpop.f32.mrf.mxu0
        %v2767 = vadd.f32 %v2551, %v2766
        %v2768 = vpop.f32.mrf.mxu0
        %2769 = vmatprep.mubr.bf16.mxu0 0
        %2770 = vmatmul.mubr.bf16.gmra.mxu0 %v2620
        %v2771 = vpop.f32.mrf.mxu0
        %v2772 = vadd.f32 %v2551, %v2771
        %v2773 = vpop.f32.mrf.mxu0
        %v2774 = vpop.f32.mrf.mxu0
        %v2775 = vadd.f32 %v2551, %v2774
        %v2776 = vpop.f32.mrf.mxu0
        %2777 = vmatprep.mubr.bf16.mxu0 0
        %2778 = vmatmul.mubr.bf16.gmra.mxu0 %v2623
        %v2779 = vpop.f32.mrf.mxu0
        %v2780 = vadd.f32 %v2551, %v2779
        %v2781 = vpop.f32.mrf.mxu0
        %v2782 = vpop.f32.mrf.mxu0
        %v2783 = vadd.f32 %v2551, %v2782
        %v2784 = vpop.f32.mrf.mxu0
        %2785 = vdwg.mxu0
        %2786 = vst [vmem:[%s434] sm:$0xff] %v2660
        %2787 = vst [vmem:[%s434 + $0x8] sm:$0xff] %v2663
        %2788 = vst [vmem:[%s434 + $0x10] sm:$0xff] %v2668
        %2789 = vst [vmem:[%s434 + $0x18] sm:$0xff] %v2671
        %2790 = vst [vmem:[%s434 + $0x20] sm:$0xff] %v2676
        %2791 = vst [vmem:[%s434 + $0x28] sm:$0xff] %v2679
        %2792 = vst [vmem:[%s434 + $0x30] sm:$0xff] %v2684
        %2793 = vst [vmem:[%s434 + $0x38] sm:$0xff] %v2687
        %2794 = vst [vmem:[%s434 + $0x40] sm:$0xff] %v2692
        %2795 = vst [vmem:[%s434 + $0x48] sm:$0xff] %v2695
        %2796 = vst [vmem:[%s434 + $0x50] sm:$0xff] %v2700
        %2797 = vst [vmem:[%s434 + $0x58] sm:$0xff] %v2703
        %2798 = vst [vmem:[%s434 + $0x60] sm:$0xff] %v2708
        %2799 = vst [vmem:[%s434 + $0x68] sm:$0xff] %v2711
        %2800 = vst [vmem:[%s434 + $0x70] sm:$0xff] %v2716
        %2801 = vst [vmem:[%s434 + $0x78] sm:$0xff] %v2719
        %2802 = vst [vmem:[%s434 + $0x80] sm:$0xff] %v2724
        %2803 = vst [vmem:[%s434 + $0x88] sm:$0xff] %v2727
        %2804 = vst [vmem:[%s434 + $0x90] sm:$0xff] %v2732
        %2805 = vst [vmem:[%s434 + $0x98] sm:$0xff] %v2735
        %2806 = vst [vmem:[%s434 + $0xa0] sm:$0xff] %v2740
        %2807 = vst [vmem:[%s434 + $0xa8] sm:$0xff] %v2743
        %2808 = vst [vmem:[%s434 + $0xb0] sm:$0xff] %v2748
        %2809 = vst [vmem:[%s434 + $0xb8] sm:$0xff] %v2751
        %2810 = vst [vmem:[%s434 + $0xc0] sm:$0xff] %v2756
        %2811 = vst [vmem:[%s434 + $0xc8] sm:$0xff] %v2759
        %2812 = vst [vmem:[%s434 + $0xd0] sm:$0xff] %v2764
        %2813 = vst [vmem:[%s434 + $0xd8] sm:$0xff] %v2767
        %2814 = vst [vmem:[%s434 + $0xe0] sm:$0xff] %v2772
        %2815 = vst [vmem:[%s434 + $0xe8] sm:$0xff] %v2775
        %2816 = vst [vmem:[%s434 + $0xf0] sm:$0xff] %v2780
        %2817 = vst [vmem:[%s434 + $0xf8] sm:$0xff] %v2783
        %s2818 = sand.u32 %s313, 1
        %s2819 = scalar_lea.sflag [#allocation3], %s2818
        %s2820 = sand.u32 %s313, 1
        %s2821 = smul.addr %s2820, 256
        %s2822 = scalar_lea.vmem [#allocation2], %s2821
        // Predicated region
        $region73: #{tpu_custom_call.1} parent=71 // pred_check
          %p2823 = pneg %p323
        $region74: #{tpu_custom_call.1} parent=71 // pred_check_branch
          %2825 = sbr.rel (%p2823) target = $region76
        $region75: #{tpu_custom_call.1} parent=71 // pred_region
          %s2826 = smul.u32 32, %s27
          %s2828 = ssub.s32 4096, 4096
          %2829 = vsyncadd %s2819, %s2828
          %s2830 = smul.addr %s2826, 128
          %s2831 = scalar_lea.hbm %s13, %s2830
          %s2832 = sshll.u32 %s2822, 4
          %s2833 = int_to_ptr.vmem [resolvable:$true] %s2832
          %2838 = dma.vmem_to_hbm [thread:$0]  %s2833, 4096, %s2831, %s2819, 128, 128, 8
        $region76: #{tpu_custom_call.1} parent=71 // pred_fallthru
          _
      $region72: #{tpu_custom_call.1} parent=5 // pred_fallthru
        _
      %p2839 = scmp.le.s32.totalorder 2, %s22
      // Predicated region
      $region77: #{tpu_custom_call.1} parent=5 // pred_check
        %p2840 = pneg %p2839
      $region78: #{tpu_custom_call.1} parent=5 // pred_check_branch
        %2842 = sbr.rel (%p2840) target = $region80
      $region79: #{tpu_custom_call.1} parent=5 // pred_region
        %s2843 = ssub.s32 %s22, 2
        // Predicated region
        $region81: #{tpu_custom_call.1} parent=79 // pred_check
          %p2844 = pneg %p329
        $region82: #{tpu_custom_call.1} parent=79 // pred_check_branch
          %2846 = sbr.rel (%p2844) target = $region84
        $region83: #{tpu_custom_call.1} parent=79 // pred_region
          %s2847 = sand.u32 %s314, 1
          %s2848 = scalar_lea.sflag [#allocation3], %s2847
          %s2849 = sand.u32 %s314, 1
          %s2850 = smul.addr %s2849, 256
          %s2851 = scalar_lea.vmem [#allocation2], %s2850
          %2852 = dma.done %s2848, 4096
        $region84: #{tpu_custom_call.1} parent=79 // pred_fallthru
          _
      $region80: #{tpu_custom_call.1} parent=5 // pred_fallthru
        _
    $region6: #{tpu_custom_call.1} parent=1 // loop_footer
      %s26 = sadd.s32 1, %s22
    $region7: #{tpu_custom_call.1} parent=1 // loop_footer_branch
      %21 = sbr.rel target = $region3
    $region8: #{tpu_custom_call.1} parent=1 // loop_exit
      _
    %2853 = vsyncpa [#allocation3], 1
    %s2854 = scalar_lea.sflag [#allocation3], 1
    %2855 = vsyncpa %s2854, 1

</llo_original>
